<compile_context>
chip_gen: v7x
topology: tpu7x:2x2x1
jax: 0.10.0
libtpu: 0.0.40
codegen_flags: <defaults>
</compile_context>

<pallas_src>
from functools import partial

import jax
import jax.numpy as jnp
from jax.experimental import pallas as pl
from jax.experimental.pallas import tpu as pltpu
import numpy as np


def _lstm_fc_kernel(x_ref,        # (T*B, D)  bf16, row = t*B + b (time-major)
                    wih0_ref,     # (D, 4H)   bf16
                    b0_ref,       # (1, 4H)   f32  = b_ih0 + b_hh0
                    wrec_ref,     # (2H, 8H)  bf16 fused [[whh0, wih1],[0, whh1]]
                    b1_ref,       # (1, 4H)   f32  = b_ih1 + b_hh1
                    wfc_ref,      # (H, Cp)   bf16, zero-padded to lane-dense Cp
                    bfc_ref,      # (1, Cp)   f32, zero-padded
                    out_ref,      # (B, Cp)   f32
                    *, B, T):
    H = wrec_ref.shape[0] // 2
    f32 = jnp.float32
    bf16 = jnp.bfloat16

    w_rec = wrec_ref[...]          # hoisted loads (loop-invariant)
    b1 = b1_ref[...]

    def cell_tail(gates, c):
        # Full-width transcendentals (one sigmoid + one tanh over (B, 4H)),
        # then slice the gates out of the already-activated vreg.
        sg = jax.nn.sigmoid(gates)
        th = jnp.tanh(gates)
        i_g = sg[:, 0 * H:1 * H]
        f_g = sg[:, 1 * H:2 * H]
        g_g = th[:, 2 * H:3 * H]
        o_g = sg[:, 3 * H:4 * H]
        c_new = f_g * c + i_g * g_g
        h_new = o_g * jnp.tanh(c_new)
        return h_new, c_new

    # ---- Phase 1: layer-0 input projection over all timesteps (one MXU GEMM) ----
    xp = jnp.dot(x_ref[...], wih0_ref[...], preferred_element_type=f32) + b0_ref[...]
    # xp row s*B + b : contiguous (B, 4H) row block per timestep s.

    # ---- Phase 2: fused two-layer wavefront recurrence ----
    # Wave step 0: both hidden states are zero -> no recurrent GEMM needed.
    h0_new, c0 = cell_tail(xp[0:B, :], jnp.zeros((B, H), f32))
    h0 = h0_new.astype(bf16)
    h1 = jnp.zeros((B, H), bf16)
    c1 = jnp.zeros((B, H), f32)

    for s in range(1, T + 1):                    # static -> fully unrolled
        hcat = jnp.concatenate([h0, h1], axis=-1)                    # (B, 2H) bf16
        rec = jnp.dot(hcat, w_rec, preferred_element_type=f32)       # (B, 8H) f32
        # layer-1 cell at time s-1: input h0_{s-1} (@wih1) + recurrent h1_{s-2} (@whh1)
        h1_new, c1 = cell_tail(rec[:, 4 * H:] + b1, c1)
        h1 = h1_new.astype(bf16)
        # layer-0 cell at time s (last one runs at s = T-1)
        if s < T:
            h0_new, c0 = cell_tail(xp[s * B:(s + 1) * B, :] + rec[:, :4 * H], c0)
            h0 = h0_new.astype(bf16)

    # ---- Phase 3: fc head on the final layer-1 hidden state (lane-dense store) ----
    out_ref[...] = (jnp.dot(h1, wfc_ref[...], preferred_element_type=f32)
                    + bfc_ref[...])


def prepare_params(params):
    """One-time packing of weights into kernel-ready form (bf16 cast, wavefront
    fusion, lane padding). Hoisted out of the per-call forward path."""
    H = params["whh0"].shape[0]
    C = params["wfc"].shape[1]
    C_pad = 128                               # lane-dense output slab
    bf16 = jnp.bfloat16

    # Fused wavefront recurrent weight: [[whh0, wih1], [0, whh1]]  -> (2H, 8H)
    w_rec = jnp.zeros((2 * H, 8 * H), jnp.float32)
    w_rec = w_rec.at[:H, :4 * H].set(params["whh0"])
    w_rec = w_rec.at[:H, 4 * H:].set(params["wih1"])
    w_rec = w_rec.at[H:, 4 * H:].set(params["whh1"])

    wfc_p = jnp.zeros((H, C_pad), jnp.float32).at[:, :C].set(params["wfc"])
    bfc_p = jnp.zeros((1, C_pad), jnp.float32).at[:, :C].set(params["bfc"])

    return {
        "wih0": params["wih0"].astype(bf16),
        "b0": params["b0"],
        "w_rec": w_rec.astype(bf16),
        "b1": params["b1"],
        "wfc_p": wfc_p.astype(bf16),
        "bfc_p": bfc_p,
    }


def emotion_classifier_forward(x, prep, num_classes):
    """x: (B, T, D) float32, batch_first like PyTorch. Returns (B, num_classes) f32."""
    B, T, D = x.shape
    C_pad = prep["wfc_p"].shape[1]

    # (B, T, D) -> time-major (T*B, D) so per-step gate blocks are contiguous
    # row slices inside the kernel; x is read exactly once either way.
    x_tm = jnp.transpose(x, (1, 0, 2)).reshape(T * B, D).astype(jnp.bfloat16)

    vmem = pl.BlockSpec(memory_space=pltpu.MemorySpace.VMEM)
    out_pad = pl.pallas_call(
        partial(_lstm_fc_kernel, B=B, T=T),
        out_shape=jax.ShapeDtypeStruct((B, C_pad), jnp.float32),
        in_specs=[vmem] * 7,
        out_specs=vmem,
    )(x_tm, prep["wih0"], prep["b0"], prep["w_rec"], prep["b1"],
      prep["wfc_p"], prep["bfc_p"])
    # TODO(synk): for large B / long T, add a grid over the batch axis with
    # BlockSpec tiles + dimension_semantics=("parallel",) (2 TCs on v7x) and
    # time-block the f32 xp slab against v7x's 64 MiB VMEM (vmem_limit_bytes).
    return out_pad[:, :num_classes]


def init_params(key, input_dim, hidden_dim, num_classes):
    """Deterministic synthetic parameters (PyTorch-style uniform(-1/sqrt(H), 1/sqrt(H))).
    Stored in f32 and pre-transposed for `x @ W`; prepare_params() packs them."""
    H = hidden_dim
    bound = 1.0 / np.sqrt(H)
    ks = jax.random.split(key, 11)

    def u(k, shape):
        return jax.random.uniform(k, shape, jnp.float32, -bound, bound)

    wih0 = u(ks[0], (input_dim, 4 * H))
    whh0 = u(ks[1], (H, 4 * H))
    b_ih0 = u(ks[2], (1, 4 * H))
    b_hh0 = u(ks[3], (1, 4 * H))
    wih1 = u(ks[4], (H, 4 * H))
    whh1 = u(ks[5], (H, 4 * H))
    b_ih1 = u(ks[6], (1, 4 * H))
    b_hh1 = u(ks[7], (1, 4 * H))
    wfc = u(ks[8], (H, num_classes))
    bfc = u(ks[9], (1, num_classes))
    return {
        "wih0": wih0, "whh0": whh0, "b0": b_ih0 + b_hh0,
        "wih1": wih1, "whh1": whh1, "b1": b_ih1 + b_hh1,
        "wfc": wfc, "bfc": bfc,
    }


def _reference_forward(x, p):
    """Pure-JAX f32 reference (mirrors PyTorch LSTM math, eval mode)."""
    B, T, D = x.shape
    H = p["whh0"].shape[0]

    def cell(x_t, h, c, wih, whh, b):
        g = x_t @ wih + h @ whh + b
        i = jax.nn.sigmoid(g[:, 0 * H:1 * H])
        f = jax.nn.sigmoid(g[:, 1 * H:2 * H])
        gg = jnp.tanh(g[:, 2 * H:3 * H])
        o = jax.nn.sigmoid(g[:, 3 * H:4 * H])
        c = f * c + i * gg
        return o * jnp.tanh(c), c

    h0 = c0 = h1 = c1 = jnp.zeros((B, H), jnp.float32)
    for t in range(T):
        h0, c0 = cell(x[:, t, :], h0, c0, p["wih0"], p["whh0"], p["b0"])
        h1, c1 = cell(h0, h1, c1, p["wih1"], p["whh1"], p["b1"])
    return h1 @ p["wfc"] + p["bfc"]


if __name__ == "__main__":
    B, T = 2, 8
    input_dim, hidden_dim, num_classes = 16, 32, 6

    key = jax.random.PRNGKey(0)
    k_x, k_p = jax.random.split(key)
    x = jax.random.normal(k_x, (B, T, input_dim), jnp.float32)
    params = init_params(k_p, input_dim, hidden_dim, num_classes)
    prep = prepare_params(params)          # one-time weight packing (hoisted)

    out = emotion_classifier_forward(x, prep, num_classes)
    out = jax.block_until_ready(out)
    assert out.shape == (B, num_classes)

    ref = _reference_forward(x, params)
    # Note: h / weights are bf16-quantized inside the kernel (acceptable drift
    # vs the f32 reference at H=32, T=8; documented precision tradeoff).
    np.testing.assert_allclose(np.asarray(out), np.asarray(ref), rtol=2e-2, atol=2e-2)

    print("KERNEL_OK")
</pallas_src>

<mosaic_0001>
module attributes {stable_mosaic.version = 11 : i64} {
  func.func @_lstm_fc_kernel(%arg0: memref<16x16xbf16, #tpu.memory_space<vmem>>, %arg1: memref<16x128xbf16, #tpu.memory_space<vmem>>, %arg2: memref<1x128xf32, #tpu.memory_space<vmem>>, %arg3: memref<64x256xbf16, #tpu.memory_space<vmem>>, %arg4: memref<1x128xf32, #tpu.memory_space<vmem>>, %arg5: memref<32x128xbf16, #tpu.memory_space<vmem>>, %arg6: memref<1x128xf32, #tpu.memory_space<vmem>>, %arg7: memref<2x128xf32, #tpu.memory_space<vmem>>) attributes {dimension_semantics = [], scalar_prefetch = 0 : i64, scratch_operands = 0 : i64, tpu.core_type = #tpu.core_type<tc>} {
    %c0 = arith.constant 0 : index
    %c0_0 = arith.constant 0 : index
    %0 = vector.load %arg3[%c0, %c0_0] : memref<64x256xbf16, #tpu.memory_space<vmem>>, vector<64x256xbf16>
    %c0_1 = arith.constant 0 : index
    %c0_2 = arith.constant 0 : index
    %1 = vector.load %arg4[%c0_1, %c0_2] : memref<1x128xf32, #tpu.memory_space<vmem>>, vector<1x128xf32>
    %c0_3 = arith.constant 0 : index
    %c0_4 = arith.constant 0 : index
    %2 = vector.load %arg0[%c0_3, %c0_4] : memref<16x16xbf16, #tpu.memory_space<vmem>>, vector<16x16xbf16>
    %c0_5 = arith.constant 0 : index
    %c0_6 = arith.constant 0 : index
    %3 = vector.load %arg1[%c0_5, %c0_6] : memref<16x128xbf16, #tpu.memory_space<vmem>>, vector<16x128xbf16>
    %cst = arith.constant dense<0.000000e+00> : vector<16x128xf32>
    %4 = tpu.matmul %2, %3, %cst {dimension_numbers = #tpu.dot_dimension_numbers<[1], [0], [0], [1], [0, 0, 1, 1], [], []>} : vector<16x16xbf16>, vector<16x128xbf16>, vector<16x128xf32> -> vector<16x128xf32>
    %c0_7 = arith.constant 0 : index
    %c0_8 = arith.constant 0 : index
    %5 = vector.load %arg2[%c0_7, %c0_8] : memref<1x128xf32, #tpu.memory_space<vmem>>, vector<1x128xf32>
    %6 = vector.broadcast %5 : vector<1x128xf32> to vector<16x128xf32>
    %7 = arith.addf %4, %6 : vector<16x128xf32>
    %8 = vector.extract_strided_slice %7 {offsets = [0, 0], sizes = [2, 128], strides = [1, 1]} : vector<16x128xf32> to vector<2x128xf32>
    %cst_9 = arith.constant 0.000000e+00 : f32
    %9 = vector.broadcast %cst_9 : f32 to vector<2x32xf32>
    %10 = arith.negf %8 : vector<2x128xf32>
    %11 = math.exp %10 : vector<2x128xf32>
    %cst_10 = arith.constant 1.000000e+00 : f32
    %12 = vector.broadcast %cst_10 : f32 to vector<2x128xf32>
    %13 = arith.addf %12, %11 : vector<2x128xf32>
    %14 = arith.divf %12, %13 : vector<2x128xf32>
    %15 = math.tanh %8 : vector<2x128xf32>
    %16 = vector.extract_strided_slice %14 {offsets = [0, 0], sizes = [2, 32], strides = [1, 1]} : vector<2x128xf32> to vector<2x32xf32>
    %17 = vector.extract_strided_slice %14 {offsets = [0, 32], sizes = [2, 32], strides = [1, 1]} : vector<2x128xf32> to vector<2x32xf32>
    %18 = vector.extract_strided_slice %15 {offsets = [0, 64], sizes = [2, 32], strides = [1, 1]} : vector<2x128xf32> to vector<2x32xf32>
    %19 = vector.extract_strided_slice %14 {offsets = [0, 96], sizes = [2, 32], strides = [1, 1]} : vector<2x128xf32> to vector<2x32xf32>
    %20 = arith.mulf %17, %9 : vector<2x32xf32>
    %21 = arith.mulf %16, %18 : vector<2x32xf32>
    %22 = arith.addf %20, %21 : vector<2x32xf32>
    %23 = math.tanh %22 : vector<2x32xf32>
    %24 = arith.mulf %19, %23 : vector<2x32xf32>
    %25 = arith.truncf %24 : vector<2x32xf32> to vector<2x32xbf16>
    %cst_11 = arith.constant 0.000000e+00 : bf16
    %26 = vector.broadcast %cst_11 : bf16 to vector<2x32xbf16>
    %cst_12 = arith.constant 0.000000e+00 : f32
    %27 = vector.broadcast %cst_12 : f32 to vector<2x32xf32>
    %28 = tpu.concatenate %25, %26 in 1 : vector<2x32xbf16>, vector<2x32xbf16> -> vector<2x64xbf16>
    %cst_13 = arith.constant dense<0.000000e+00> : vector<2x256xf32>
    %29 = tpu.matmul %28, %0, %cst_13 {dimension_numbers = #tpu.dot_dimension_numbers<[1], [0], [0], [1], [0, 0, 1, 1], [], []>} : vector<2x64xbf16>, vector<64x256xbf16>, vector<2x256xf32> -> vector<2x256xf32>
    %30 = vector.extract_strided_slice %29 {offsets = [0, 128], sizes = [2, 128], strides = [1, 1]} : vector<2x256xf32> to vector<2x128xf32>
    %31 = vector.broadcast %1 : vector<1x128xf32> to vector<2x128xf32>
    %32 = arith.addf %30, %31 : vector<2x128xf32>
    %33 = arith.negf %32 : vector<2x128xf32>
    %34 = math.exp %33 : vector<2x128xf32>
    %cst_14 = arith.constant 1.000000e+00 : f32
    %35 = vector.broadcast %cst_14 : f32 to vector<2x128xf32>
    %36 = arith.addf %35, %34 : vector<2x128xf32>
    %37 = arith.divf %35, %36 : vector<2x128xf32>
    %38 = math.tanh %32 : vector<2x128xf32>
    %39 = vector.extract_strided_slice %37 {offsets = [0, 0], sizes = [2, 32], strides = [1, 1]} : vector<2x128xf32> to vector<2x32xf32>
    %40 = vector.extract_strided_slice %37 {offsets = [0, 32], sizes = [2, 32], strides = [1, 1]} : vector<2x128xf32> to vector<2x32xf32>
    %41 = vector.extract_strided_slice %38 {offsets = [0, 64], sizes = [2, 32], strides = [1, 1]} : vector<2x128xf32> to vector<2x32xf32>
    %42 = vector.extract_strided_slice %37 {offsets = [0, 96], sizes = [2, 32], strides = [1, 1]} : vector<2x128xf32> to vector<2x32xf32>
    %43 = arith.mulf %40, %27 : vector<2x32xf32>
    %44 = arith.mulf %39, %41 : vector<2x32xf32>
    %45 = arith.addf %43, %44 : vector<2x32xf32>
    %46 = math.tanh %45 : vector<2x32xf32>
    %47 = arith.mulf %42, %46 : vector<2x32xf32>
    %48 = arith.truncf %47 : vector<2x32xf32> to vector<2x32xbf16>
    %49 = vector.extract_strided_slice %7 {offsets = [2, 0], sizes = [2, 128], strides = [1, 1]} : vector<16x128xf32> to vector<2x128xf32>
    %50 = vector.extract_strided_slice %29 {offsets = [0, 0], sizes = [2, 128], strides = [1, 1]} : vector<2x256xf32> to vector<2x128xf32>
    %51 = arith.addf %49, %50 : vector<2x128xf32>
    %52 = arith.negf %51 : vector<2x128xf32>
    %53 = math.exp %52 : vector<2x128xf32>
    %cst_15 = arith.constant 1.000000e+00 : f32
    %54 = vector.broadcast %cst_15 : f32 to vector<2x128xf32>
    %55 = arith.addf %54, %53 : vector<2x128xf32>
    %56 = arith.divf %54, %55 : vector<2x128xf32>
    %57 = math.tanh %51 : vector<2x128xf32>
    %58 = vector.extract_strided_slice %56 {offsets = [0, 0], sizes = [2, 32], strides = [1, 1]} : vector<2x128xf32> to vector<2x32xf32>
    %59 = vector.extract_strided_slice %56 {offsets = [0, 32], sizes = [2, 32], strides = [1, 1]} : vector<2x128xf32> to vector<2x32xf32>
    %60 = vector.extract_strided_slice %57 {offsets = [0, 64], sizes = [2, 32], strides = [1, 1]} : vector<2x128xf32> to vector<2x32xf32>
    %61 = vector.extract_strided_slice %56 {offsets = [0, 96], sizes = [2, 32], strides = [1, 1]} : vector<2x128xf32> to vector<2x32xf32>
    %62 = arith.mulf %59, %22 : vector<2x32xf32>
    %63 = arith.mulf %58, %60 : vector<2x32xf32>
    %64 = arith.addf %62, %63 : vector<2x32xf32>
    %65 = math.tanh %64 : vector<2x32xf32>
    %66 = arith.mulf %61, %65 : vector<2x32xf32>
    %67 = arith.truncf %66 : vector<2x32xf32> to vector<2x32xbf16>
    %68 = tpu.concatenate %67, %48 in 1 : vector<2x32xbf16>, vector<2x32xbf16> -> vector<2x64xbf16>
    %cst_16 = arith.constant dense<0.000000e+00> : vector<2x256xf32>
    %69 = tpu.matmul %68, %0, %cst_16 {dimension_numbers = #tpu.dot_dimension_numbers<[1], [0], [0], [1], [0, 0, 1, 1], [], []>} : vector<2x64xbf16>, vector<64x256xbf16>, vector<2x256xf32> -> vector<2x256xf32>
    %70 = vector.extract_strided_slice %69 {offsets = [0, 128], sizes = [2, 128], strides = [1, 1]} : vector<2x256xf32> to vector<2x128xf32>
    %71 = vector.broadcast %1 : vector<1x128xf32> to vector<2x128xf32>
    %72 = arith.addf %70, %71 : vector<2x128xf32>
    %73 = arith.negf %72 : vector<2x128xf32>
    %74 = math.exp %73 : vector<2x128xf32>
    %cst_17 = arith.constant 1.000000e+00 : f32
    %75 = vector.broadcast %cst_17 : f32 to vector<2x128xf32>
    %76 = arith.addf %75, %74 : vector<2x128xf32>
    %77 = arith.divf %75, %76 : vector<2x128xf32>
    %78 = math.tanh %72 : vector<2x128xf32>
    %79 = vector.extract_strided_slice %77 {offsets = [0, 0], sizes = [2, 32], strides = [1, 1]} : vector<2x128xf32> to vector<2x32xf32>
    %80 = vector.extract_strided_slice %77 {offsets = [0, 32], sizes = [2, 32], strides = [1, 1]} : vector<2x128xf32> to vector<2x32xf32>
    %81 = vector.extract_strided_slice %78 {offsets = [0, 64], sizes = [2, 32], strides = [1, 1]} : vector<2x128xf32> to vector<2x32xf32>
    %82 = vector.extract_strided_slice %77 {offsets = [0, 96], sizes = [2, 32], strides = [1, 1]} : vector<2x128xf32> to vector<2x32xf32>
    %83 = arith.mulf %80, %45 : vector<2x32xf32>
    %84 = arith.mulf %79, %81 : vector<2x32xf32>
    %85 = arith.addf %83, %84 : vector<2x32xf32>
    %86 = math.tanh %85 : vector<2x32xf32>
    %87 = arith.mulf %82, %86 : vector<2x32xf32>
    %88 = arith.truncf %87 : vector<2x32xf32> to vector<2x32xbf16>
    %89 = vector.extract_strided_slice %7 {offsets = [4, 0], sizes = [2, 128], strides = [1, 1]} : vector<16x128xf32> to vector<2x128xf32>
    %90 = vector.extract_strided_slice %69 {offsets = [0, 0], sizes = [2, 128], strides = [1, 1]} : vector<2x256xf32> to vector<2x128xf32>
    %91 = arith.addf %89, %90 : vector<2x128xf32>
    %92 = arith.negf %91 : vector<2x128xf32>
    %93 = math.exp %92 : vector<2x128xf32>
    %cst_18 = arith.constant 1.000000e+00 : f32
    %94 = vector.broadcast %cst_18 : f32 to vector<2x128xf32>
    %95 = arith.addf %94, %93 : vector<2x128xf32>
    %96 = arith.divf %94, %95 : vector<2x128xf32>
    %97 = math.tanh %91 : vector<2x128xf32>
    %98 = vector.extract_strided_slice %96 {offsets = [0, 0], sizes = [2, 32], strides = [1, 1]} : vector<2x128xf32> to vector<2x32xf32>
    %99 = vector.extract_strided_slice %96 {offsets = [0, 32], sizes = [2, 32], strides = [1, 1]} : vector<2x128xf32> to vector<2x32xf32>
    %100 = vector.extract_strided_slice %97 {offsets = [0, 64], sizes = [2, 32], strides = [1, 1]} : vector<2x128xf32> to vector<2x32xf32>
    %101 = vector.extract_strided_slice %96 {offsets = [0, 96], sizes = [2, 32], strides = [1, 1]} : vector<2x128xf32> to vector<2x32xf32>
    %102 = arith.mulf %99, %64 : vector<2x32xf32>
    %103 = arith.mulf %98, %100 : vector<2x32xf32>
    %104 = arith.addf %102, %103 : vector<2x32xf32>
    %105 = math.tanh %104 : vector<2x32xf32>
    %106 = arith.mulf %101, %105 : vector<2x32xf32>
    %107 = arith.truncf %106 : vector<2x32xf32> to vector<2x32xbf16>
    %108 = tpu.concatenate %107, %88 in 1 : vector<2x32xbf16>, vector<2x32xbf16> -> vector<2x64xbf16>
    %cst_19 = arith.constant dense<0.000000e+00> : vector<2x256xf32>
    %109 = tpu.matmul %108, %0, %cst_19 {dimension_numbers = #tpu.dot_dimension_numbers<[1], [0], [0], [1], [0, 0, 1, 1], [], []>} : vector<2x64xbf16>, vector<64x256xbf16>, vector<2x256xf32> -> vector<2x256xf32>
    %110 = vector.extract_strided_slice %109 {offsets = [0, 128], sizes = [2, 128], strides = [1, 1]} : vector<2x256xf32> to vector<2x128xf32>
    %111 = vector.broadcast %1 : vector<1x128xf32> to vector<2x128xf32>
    %112 = arith.addf %110, %111 : vector<2x128xf32>
    %113 = arith.negf %112 : vector<2x128xf32>
    %114 = math.exp %113 : vector<2x128xf32>
    %cst_20 = arith.constant 1.000000e+00 : f32
    %115 = vector.broadcast %cst_20 : f32 to vector<2x128xf32>
    %116 = arith.addf %115, %114 : vector<2x128xf32>
    %117 = arith.divf %115, %116 : vector<2x128xf32>
    %118 = math.tanh %112 : vector<2x128xf32>
    %119 = vector.extract_strided_slice %117 {offsets = [0, 0], sizes = [2, 32], strides = [1, 1]} : vector<2x128xf32> to vector<2x32xf32>
    %120 = vector.extract_strided_slice %117 {offsets = [0, 32], sizes = [2, 32], strides = [1, 1]} : vector<2x128xf32> to vector<2x32xf32>
    %121 = vector.extract_strided_slice %118 {offsets = [0, 64], sizes = [2, 32], strides = [1, 1]} : vector<2x128xf32> to vector<2x32xf32>
    %122 = vector.extract_strided_slice %117 {offsets = [0, 96], sizes = [2, 32], strides = [1, 1]} : vector<2x128xf32> to vector<2x32xf32>
    %123 = arith.mulf %120, %85 : vector<2x32xf32>
    %124 = arith.mulf %119, %121 : vector<2x32xf32>
    %125 = arith.addf %123, %124 : vector<2x32xf32>
    %126 = math.tanh %125 : vector<2x32xf32>
    %127 = arith.mulf %122, %126 : vector<2x32xf32>
    %128 = arith.truncf %127 : vector<2x32xf32> to vector<2x32xbf16>
    %129 = vector.extract_strided_slice %7 {offsets = [6, 0], sizes = [2, 128], strides = [1, 1]} : vector<16x128xf32> to vector<2x128xf32>
    %130 = vector.extract_strided_slice %109 {offsets = [0, 0], sizes = [2, 128], strides = [1, 1]} : vector<2x256xf32> to vector<2x128xf32>
    %131 = arith.addf %129, %130 : vector<2x128xf32>
    %132 = arith.negf %131 : vector<2x128xf32>
    %133 = math.exp %132 : vector<2x128xf32>
    %cst_21 = arith.constant 1.000000e+00 : f32
    %134 = vector.broadcast %cst_21 : f32 to vector<2x128xf32>
    %135 = arith.addf %134, %133 : vector<2x128xf32>
    %136 = arith.divf %134, %135 : vector<2x128xf32>
    %137 = math.tanh %131 : vector<2x128xf32>
    %138 = vector.extract_strided_slice %136 {offsets = [0, 0], sizes = [2, 32], strides = [1, 1]} : vector<2x128xf32> to vector<2x32xf32>
    %139 = vector.extract_strided_slice %136 {offsets = [0, 32], sizes = [2, 32], strides = [1, 1]} : vector<2x128xf32> to vector<2x32xf32>
    %140 = vector.extract_strided_slice %137 {offsets = [0, 64], sizes = [2, 32], strides = [1, 1]} : vector<2x128xf32> to vector<2x32xf32>
    %141 = vector.extract_strided_slice %136 {offsets = [0, 96], sizes = [2, 32], strides = [1, 1]} : vector<2x128xf32> to vector<2x32xf32>
    %142 = arith.mulf %139, %104 : vector<2x32xf32>
    %143 = arith.mulf %138, %140 : vector<2x32xf32>
    %144 = arith.addf %142, %143 : vector<2x32xf32>
    %145 = math.tanh %144 : vector<2x32xf32>
    %146 = arith.mulf %141, %145 : vector<2x32xf32>
    %147 = arith.truncf %146 : vector<2x32xf32> to vector<2x32xbf16>
    %148 = tpu.concatenate %147, %128 in 1 : vector<2x32xbf16>, vector<2x32xbf16> -> vector<2x64xbf16>
    %cst_22 = arith.constant dense<0.000000e+00> : vector<2x256xf32>
    %149 = tpu.matmul %148, %0, %cst_22 {dimension_numbers = #tpu.dot_dimension_numbers<[1], [0], [0], [1], [0, 0, 1, 1], [], []>} : vector<2x64xbf16>, vector<64x256xbf16>, vector<2x256xf32> -> vector<2x256xf32>
    %150 = vector.extract_strided_slice %149 {offsets = [0, 128], sizes = [2, 128], strides = [1, 1]} : vector<2x256xf32> to vector<2x128xf32>
    %151 = vector.broadcast %1 : vector<1x128xf32> to vector<2x128xf32>
    %152 = arith.addf %150, %151 : vector<2x128xf32>
    %153 = arith.negf %152 : vector<2x128xf32>
    %154 = math.exp %153 : vector<2x128xf32>
    %cst_23 = arith.constant 1.000000e+00 : f32
    %155 = vector.broadcast %cst_23 : f32 to vector<2x128xf32>
    %156 = arith.addf %155, %154 : vector<2x128xf32>
    %157 = arith.divf %155, %156 : vector<2x128xf32>
    %158 = math.tanh %152 : vector<2x128xf32>
    %159 = vector.extract_strided_slice %157 {offsets = [0, 0], sizes = [2, 32], strides = [1, 1]} : vector<2x128xf32> to vector<2x32xf32>
    %160 = vector.extract_strided_slice %157 {offsets = [0, 32], sizes = [2, 32], strides = [1, 1]} : vector<2x128xf32> to vector<2x32xf32>
    %161 = vector.extract_strided_slice %158 {offsets = [0, 64], sizes = [2, 32], strides = [1, 1]} : vector<2x128xf32> to vector<2x32xf32>
    %162 = vector.extract_strided_slice %157 {offsets = [0, 96], sizes = [2, 32], strides = [1, 1]} : vector<2x128xf32> to vector<2x32xf32>
    %163 = arith.mulf %160, %125 : vector<2x32xf32>
    %164 = arith.mulf %159, %161 : vector<2x32xf32>
    %165 = arith.addf %163, %164 : vector<2x32xf32>
    %166 = math.tanh %165 : vector<2x32xf32>
    %167 = arith.mulf %162, %166 : vector<2x32xf32>
    %168 = arith.truncf %167 : vector<2x32xf32> to vector<2x32xbf16>
    %169 = vector.extract_strided_slice %7 {offsets = [8, 0], sizes = [2, 128], strides = [1, 1]} : vector<16x128xf32> to vector<2x128xf32>
    %170 = vector.extract_strided_slice %149 {offsets = [0, 0], sizes = [2, 128], strides = [1, 1]} : vector<2x256xf32> to vector<2x128xf32>
    %171 = arith.addf %169, %170 : vector<2x128xf32>
    %172 = arith.negf %171 : vector<2x128xf32>
    %173 = math.exp %172 : vector<2x128xf32>
    %cst_24 = arith.constant 1.000000e+00 : f32
    %174 = vector.broadcast %cst_24 : f32 to vector<2x128xf32>
    %175 = arith.addf %174, %173 : vector<2x128xf32>
    %176 = arith.divf %174, %175 : vector<2x128xf32>
    %177 = math.tanh %171 : vector<2x128xf32>
    %178 = vector.extract_strided_slice %176 {offsets = [0, 0], sizes = [2, 32], strides = [1, 1]} : vector<2x128xf32> to vector<2x32xf32>
    %179 = vector.extract_strided_slice %176 {offsets = [0, 32], sizes = [2, 32], strides = [1, 1]} : vector<2x128xf32> to vector<2x32xf32>
    %180 = vector.extract_strided_slice %177 {offsets = [0, 64], sizes = [2, 32], strides = [1, 1]} : vector<2x128xf32> to vector<2x32xf32>
    %181 = vector.extract_strided_slice %176 {offsets = [0, 96], sizes = [2, 32], strides = [1, 1]} : vector<2x128xf32> to vector<2x32xf32>
    %182 = arith.mulf %179, %144 : vector<2x32xf32>
    %183 = arith.mulf %178, %180 : vector<2x32xf32>
    %184 = arith.addf %182, %183 : vector<2x32xf32>
    %185 = math.tanh %184 : vector<2x32xf32>
    %186 = arith.mulf %181, %185 : vector<2x32xf32>
    %187 = arith.truncf %186 : vector<2x32xf32> to vector<2x32xbf16>
    %188 = tpu.concatenate %187, %168 in 1 : vector<2x32xbf16>, vector<2x32xbf16> -> vector<2x64xbf16>
    %cst_25 = arith.constant dense<0.000000e+00> : vector<2x256xf32>
    %189 = tpu.matmul %188, %0, %cst_25 {dimension_numbers = #tpu.dot_dimension_numbers<[1], [0], [0], [1], [0, 0, 1, 1], [], []>} : vector<2x64xbf16>, vector<64x256xbf16>, vector<2x256xf32> -> vector<2x256xf32>
    %190 = vector.extract_strided_slice %189 {offsets = [0, 128], sizes = [2, 128], strides = [1, 1]} : vector<2x256xf32> to vector<2x128xf32>
    %191 = vector.broadcast %1 : vector<1x128xf32> to vector<2x128xf32>
    %192 = arith.addf %190, %191 : vector<2x128xf32>
    %193 = arith.negf %192 : vector<2x128xf32>
    %194 = math.exp %193 : vector<2x128xf32>
    %cst_26 = arith.constant 1.000000e+00 : f32
    %195 = vector.broadcast %cst_26 : f32 to vector<2x128xf32>
    %196 = arith.addf %195, %194 : vector<2x128xf32>
    %197 = arith.divf %195, %196 : vector<2x128xf32>
    %198 = math.tanh %192 : vector<2x128xf32>
    %199 = vector.extract_strided_slice %197 {offsets = [0, 0], sizes = [2, 32], strides = [1, 1]} : vector<2x128xf32> to vector<2x32xf32>
    %200 = vector.extract_strided_slice %197 {offsets = [0, 32], sizes = [2, 32], strides = [1, 1]} : vector<2x128xf32> to vector<2x32xf32>
    %201 = vector.extract_strided_slice %198 {offsets = [0, 64], sizes = [2, 32], strides = [1, 1]} : vector<2x128xf32> to vector<2x32xf32>
    %202 = vector.extract_strided_slice %197 {offsets = [0, 96], sizes = [2, 32], strides = [1, 1]} : vector<2x128xf32> to vector<2x32xf32>
    %203 = arith.mulf %200, %165 : vector<2x32xf32>
    %204 = arith.mulf %199, %201 : vector<2x32xf32>
    %205 = arith.addf %203, %204 : vector<2x32xf32>
    %206 = math.tanh %205 : vector<2x32xf32>
    %207 = arith.mulf %202, %206 : vector<2x32xf32>
    %208 = arith.truncf %207 : vector<2x32xf32> to vector<2x32xbf16>
    %209 = vector.extract_strided_slice %7 {offsets = [10, 0], sizes = [2, 128], strides = [1, 1]} : vector<16x128xf32> to vector<2x128xf32>
    %210 = vector.extract_strided_slice %189 {offsets = [0, 0], sizes = [2, 128], strides = [1, 1]} : vector<2x256xf32> to vector<2x128xf32>
    %211 = arith.addf %209, %210 : vector<2x128xf32>
    %212 = arith.negf %211 : vector<2x128xf32>
    %213 = math.exp %212 : vector<2x128xf32>
    %cst_27 = arith.constant 1.000000e+00 : f32
    %214 = vector.broadcast %cst_27 : f32 to vector<2x128xf32>
    %215 = arith.addf %214, %213 : vector<2x128xf32>
    %216 = arith.divf %214, %215 : vector<2x128xf32>
    %217 = math.tanh %211 : vector<2x128xf32>
    %218 = vector.extract_strided_slice %216 {offsets = [0, 0], sizes = [2, 32], strides = [1, 1]} : vector<2x128xf32> to vector<2x32xf32>
    %219 = vector.extract_strided_slice %216 {offsets = [0, 32], sizes = [2, 32], strides = [1, 1]} : vector<2x128xf32> to vector<2x32xf32>
    %220 = vector.extract_strided_slice %217 {offsets = [0, 64], sizes = [2, 32], strides = [1, 1]} : vector<2x128xf32> to vector<2x32xf32>
    %221 = vector.extract_strided_slice %216 {offsets = [0, 96], sizes = [2, 32], strides = [1, 1]} : vector<2x128xf32> to vector<2x32xf32>
    %222 = arith.mulf %219, %184 : vector<2x32xf32>
    %223 = arith.mulf %218, %220 : vector<2x32xf32>
    %224 = arith.addf %222, %223 : vector<2x32xf32>
    %225 = math.tanh %224 : vector<2x32xf32>
    %226 = arith.mulf %221, %225 : vector<2x32xf32>
    %227 = arith.truncf %226 : vector<2x32xf32> to vector<2x32xbf16>
    %228 = tpu.concatenate %227, %208 in 1 : vector<2x32xbf16>, vector<2x32xbf16> -> vector<2x64xbf16>
    %cst_28 = arith.constant dense<0.000000e+00> : vector<2x256xf32>
    %229 = tpu.matmul %228, %0, %cst_28 {dimension_numbers = #tpu.dot_dimension_numbers<[1], [0], [0], [1], [0, 0, 1, 1], [], []>} : vector<2x64xbf16>, vector<64x256xbf16>, vector<2x256xf32> -> vector<2x256xf32>
    %230 = vector.extract_strided_slice %229 {offsets = [0, 128], sizes = [2, 128], strides = [1, 1]} : vector<2x256xf32> to vector<2x128xf32>
    %231 = vector.broadcast %1 : vector<1x128xf32> to vector<2x128xf32>
    %232 = arith.addf %230, %231 : vector<2x128xf32>
    %233 = arith.negf %232 : vector<2x128xf32>
    %234 = math.exp %233 : vector<2x128xf32>
    %cst_29 = arith.constant 1.000000e+00 : f32
    %235 = vector.broadcast %cst_29 : f32 to vector<2x128xf32>
    %236 = arith.addf %235, %234 : vector<2x128xf32>
    %237 = arith.divf %235, %236 : vector<2x128xf32>
    %238 = math.tanh %232 : vector<2x128xf32>
    %239 = vector.extract_strided_slice %237 {offsets = [0, 0], sizes = [2, 32], strides = [1, 1]} : vector<2x128xf32> to vector<2x32xf32>
    %240 = vector.extract_strided_slice %237 {offsets = [0, 32], sizes = [2, 32], strides = [1, 1]} : vector<2x128xf32> to vector<2x32xf32>
    %241 = vector.extract_strided_slice %238 {offsets = [0, 64], sizes = [2, 32], strides = [1, 1]} : vector<2x128xf32> to vector<2x32xf32>
    %242 = vector.extract_strided_slice %237 {offsets = [0, 96], sizes = [2, 32], strides = [1, 1]} : vector<2x128xf32> to vector<2x32xf32>
    %243 = arith.mulf %240, %205 : vector<2x32xf32>
    %244 = arith.mulf %239, %241 : vector<2x32xf32>
    %245 = arith.addf %243, %244 : vector<2x32xf32>
    %246 = math.tanh %245 : vector<2x32xf32>
    %247 = arith.mulf %242, %246 : vector<2x32xf32>
    %248 = arith.truncf %247 : vector<2x32xf32> to vector<2x32xbf16>
    %249 = vector.extract_strided_slice %7 {offsets = [12, 0], sizes = [2, 128], strides = [1, 1]} : vector<16x128xf32> to vector<2x128xf32>
    %250 = vector.extract_strided_slice %229 {offsets = [0, 0], sizes = [2, 128], strides = [1, 1]} : vector<2x256xf32> to vector<2x128xf32>
    %251 = arith.addf %249, %250 : vector<2x128xf32>
    %252 = arith.negf %251 : vector<2x128xf32>
    %253 = math.exp %252 : vector<2x128xf32>
    %cst_30 = arith.constant 1.000000e+00 : f32
    %254 = vector.broadcast %cst_30 : f32 to vector<2x128xf32>
    %255 = arith.addf %254, %253 : vector<2x128xf32>
    %256 = arith.divf %254, %255 : vector<2x128xf32>
    %257 = math.tanh %251 : vector<2x128xf32>
    %258 = vector.extract_strided_slice %256 {offsets = [0, 0], sizes = [2, 32], strides = [1, 1]} : vector<2x128xf32> to vector<2x32xf32>
    %259 = vector.extract_strided_slice %256 {offsets = [0, 32], sizes = [2, 32], strides = [1, 1]} : vector<2x128xf32> to vector<2x32xf32>
    %260 = vector.extract_strided_slice %257 {offsets = [0, 64], sizes = [2, 32], strides = [1, 1]} : vector<2x128xf32> to vector<2x32xf32>
    %261 = vector.extract_strided_slice %256 {offsets = [0, 96], sizes = [2, 32], strides = [1, 1]} : vector<2x128xf32> to vector<2x32xf32>
    %262 = arith.mulf %259, %224 : vector<2x32xf32>
    %263 = arith.mulf %258, %260 : vector<2x32xf32>
    %264 = arith.addf %262, %263 : vector<2x32xf32>
    %265 = math.tanh %264 : vector<2x32xf32>
    %266 = arith.mulf %261, %265 : vector<2x32xf32>
    %267 = arith.truncf %266 : vector<2x32xf32> to vector<2x32xbf16>
    %268 = tpu.concatenate %267, %248 in 1 : vector<2x32xbf16>, vector<2x32xbf16> -> vector<2x64xbf16>
    %cst_31 = arith.constant dense<0.000000e+00> : vector<2x256xf32>
    %269 = tpu.matmul %268, %0, %cst_31 {dimension_numbers = #tpu.dot_dimension_numbers<[1], [0], [0], [1], [0, 0, 1, 1], [], []>} : vector<2x64xbf16>, vector<64x256xbf16>, vector<2x256xf32> -> vector<2x256xf32>
    %270 = vector.extract_strided_slice %269 {offsets = [0, 128], sizes = [2, 128], strides = [1, 1]} : vector<2x256xf32> to vector<2x128xf32>
    %271 = vector.broadcast %1 : vector<1x128xf32> to vector<2x128xf32>
    %272 = arith.addf %270, %271 : vector<2x128xf32>
    %273 = arith.negf %272 : vector<2x128xf32>
    %274 = math.exp %273 : vector<2x128xf32>
    %cst_32 = arith.constant 1.000000e+00 : f32
    %275 = vector.broadcast %cst_32 : f32 to vector<2x128xf32>
    %276 = arith.addf %275, %274 : vector<2x128xf32>
    %277 = arith.divf %275, %276 : vector<2x128xf32>
    %278 = math.tanh %272 : vector<2x128xf32>
    %279 = vector.extract_strided_slice %277 {offsets = [0, 0], sizes = [2, 32], strides = [1, 1]} : vector<2x128xf32> to vector<2x32xf32>
    %280 = vector.extract_strided_slice %277 {offsets = [0, 32], sizes = [2, 32], strides = [1, 1]} : vector<2x128xf32> to vector<2x32xf32>
    %281 = vector.extract_strided_slice %278 {offsets = [0, 64], sizes = [2, 32], strides = [1, 1]} : vector<2x128xf32> to vector<2x32xf32>
    %282 = vector.extract_strided_slice %277 {offsets = [0, 96], sizes = [2, 32], strides = [1, 1]} : vector<2x128xf32> to vector<2x32xf32>
    %283 = arith.mulf %280, %245 : vector<2x32xf32>
    %284 = arith.mulf %279, %281 : vector<2x32xf32>
    %285 = arith.addf %283, %284 : vector<2x32xf32>
    %286 = math.tanh %285 : vector<2x32xf32>
    %287 = arith.mulf %282, %286 : vector<2x32xf32>
    %288 = arith.truncf %287 : vector<2x32xf32> to vector<2x32xbf16>
    %289 = vector.extract_strided_slice %7 {offsets = [14, 0], sizes = [2, 128], strides = [1, 1]} : vector<16x128xf32> to vector<2x128xf32>
    %290 = vector.extract_strided_slice %269 {offsets = [0, 0], sizes = [2, 128], strides = [1, 1]} : vector<2x256xf32> to vector<2x128xf32>
    %291 = arith.addf %289, %290 : vector<2x128xf32>
    %292 = arith.negf %291 : vector<2x128xf32>
    %293 = math.exp %292 : vector<2x128xf32>
    %cst_33 = arith.constant 1.000000e+00 : f32
    %294 = vector.broadcast %cst_33 : f32 to vector<2x128xf32>
    %295 = arith.addf %294, %293 : vector<2x128xf32>
    %296 = arith.divf %294, %295 : vector<2x128xf32>
    %297 = math.tanh %291 : vector<2x128xf32>
    %298 = vector.extract_strided_slice %296 {offsets = [0, 0], sizes = [2, 32], strides = [1, 1]} : vector<2x128xf32> to vector<2x32xf32>
    %299 = vector.extract_strided_slice %296 {offsets = [0, 32], sizes = [2, 32], strides = [1, 1]} : vector<2x128xf32> to vector<2x32xf32>
    %300 = vector.extract_strided_slice %297 {offsets = [0, 64], sizes = [2, 32], strides = [1, 1]} : vector<2x128xf32> to vector<2x32xf32>
    %301 = vector.extract_strided_slice %296 {offsets = [0, 96], sizes = [2, 32], strides = [1, 1]} : vector<2x128xf32> to vector<2x32xf32>
    %302 = arith.mulf %299, %264 : vector<2x32xf32>
    %303 = arith.mulf %298, %300 : vector<2x32xf32>
    %304 = arith.addf %302, %303 : vector<2x32xf32>
    %305 = math.tanh %304 : vector<2x32xf32>
    %306 = arith.mulf %301, %305 : vector<2x32xf32>
    %307 = arith.truncf %306 : vector<2x32xf32> to vector<2x32xbf16>
    %308 = tpu.concatenate %307, %288 in 1 : vector<2x32xbf16>, vector<2x32xbf16> -> vector<2x64xbf16>
    %cst_34 = arith.constant dense<0.000000e+00> : vector<2x256xf32>
    %309 = tpu.matmul %308, %0, %cst_34 {dimension_numbers = #tpu.dot_dimension_numbers<[1], [0], [0], [1], [0, 0, 1, 1], [], []>} : vector<2x64xbf16>, vector<64x256xbf16>, vector<2x256xf32> -> vector<2x256xf32>
    %310 = vector.extract_strided_slice %309 {offsets = [0, 128], sizes = [2, 128], strides = [1, 1]} : vector<2x256xf32> to vector<2x128xf32>
    %311 = vector.broadcast %1 : vector<1x128xf32> to vector<2x128xf32>
    %312 = arith.addf %310, %311 : vector<2x128xf32>
    %313 = arith.negf %312 : vector<2x128xf32>
    %314 = math.exp %313 : vector<2x128xf32>
    %cst_35 = arith.constant 1.000000e+00 : f32
    %315 = vector.broadcast %cst_35 : f32 to vector<2x128xf32>
    %316 = arith.addf %315, %314 : vector<2x128xf32>
    %317 = arith.divf %315, %316 : vector<2x128xf32>
    %318 = math.tanh %312 : vector<2x128xf32>
    %319 = vector.extract_strided_slice %317 {offsets = [0, 0], sizes = [2, 32], strides = [1, 1]} : vector<2x128xf32> to vector<2x32xf32>
    %320 = vector.extract_strided_slice %317 {offsets = [0, 32], sizes = [2, 32], strides = [1, 1]} : vector<2x128xf32> to vector<2x32xf32>
    %321 = vector.extract_strided_slice %318 {offsets = [0, 64], sizes = [2, 32], strides = [1, 1]} : vector<2x128xf32> to vector<2x32xf32>
    %322 = vector.extract_strided_slice %317 {offsets = [0, 96], sizes = [2, 32], strides = [1, 1]} : vector<2x128xf32> to vector<2x32xf32>
    %323 = arith.mulf %320, %285 : vector<2x32xf32>
    %324 = arith.mulf %319, %321 : vector<2x32xf32>
    %325 = arith.addf %323, %324 : vector<2x32xf32>
    %326 = math.tanh %325 : vector<2x32xf32>
    %327 = arith.mulf %322, %326 : vector<2x32xf32>
    %328 = arith.truncf %327 : vector<2x32xf32> to vector<2x32xbf16>
    %c0_36 = arith.constant 0 : index
    %c0_37 = arith.constant 0 : index
    %329 = vector.load %arg5[%c0_36, %c0_37] : memref<32x128xbf16, #tpu.memory_space<vmem>>, vector<32x128xbf16>
    %cst_38 = arith.constant dense<0.000000e+00> : vector<2x128xf32>
    %330 = tpu.matmul %328, %329, %cst_38 {dimension_numbers = #tpu.dot_dimension_numbers<[1], [0], [0], [1], [0, 0, 1, 1], [], []>} : vector<2x32xbf16>, vector<32x128xbf16>, vector<2x128xf32> -> vector<2x128xf32>
    %c0_39 = arith.constant 0 : index
    %c0_40 = arith.constant 0 : index
    %331 = vector.load %arg6[%c0_39, %c0_40] : memref<1x128xf32, #tpu.memory_space<vmem>>, vector<1x128xf32>
    %332 = vector.broadcast %331 : vector<1x128xf32> to vector<2x128xf32>
    %333 = arith.addf %330, %332 : vector<2x128xf32>
    %c0_41 = arith.constant 0 : index
    %c0_42 = arith.constant 0 : index
    %334 = vector.load %arg7[%c0_41, %c0_42] : memref<2x128xf32, #tpu.memory_space<vmem>>, vector<2x128xf32>
    tpu.vector_store %arg7[%c0_41, %c0_42], %333 {strides = array<i32>} : memref<2x128xf32, #tpu.memory_space<vmem>>, vector<2x128xf32>,
    return
  }
}

</mosaic_0001>

<llo_original>
// kernel: tpu_custom_call.1
$region0: #{tpu_custom_call.1}
  #allocation0 [shape = 'u32[]', space=smem, size = 0x4, offset = 0x4, fixed_abs, tag = 'smem constant byte address 0x4 - core index']
  #allocation1 [shape = 'u32[144,128]{1,0:T(1,128)}', space=vmem, size = 0x12000, scoped, tag = 'internal scratch']
  %s0 = inlined_call_operand.hbm [shape: bf16[16,16], index: 0, kind: input, shape index: {}]
  %s1 = inlined_call_operand.hbm [shape: bf16[16,128], index: 1, kind: input, shape index: {}]
  %s2 = inlined_call_operand.vmem [shape: f32[1,128], index: 2, kind: input, shape index: {}]
  %s3 = inlined_call_operand.hbm [shape: bf16[64,256], index: 3, kind: input, shape index: {}]
  %s4 = inlined_call_operand.vmem [shape: f32[1,128], index: 4, kind: input, shape index: {}]
  %s5 = inlined_call_operand.vmem [shape: bf16[32,128], index: 5, kind: input, shape index: {}]
  %s6 = inlined_call_operand.vmem [shape: f32[1,128], index: 6, kind: input, shape index: {}]
  %s7 = inlined_call_operand.hbm [shape: f32[2,128], index: 7, kind: output, shape index: {}]
  %s8 = sld [smem:[#allocation0]]
  $region50: #{tpu_custom_call.1} parent=0
    _
  %s10 = ssub.s32 1, %s8
  %s11 = scalar_select 0, %s10, %s8
  $region1: #{tpu_custom_call.1} parent=0
    #allocation2 [shape = 'u8[4096]{0}', space=vmem, size = 0x1000, scoped, tag = 'input window, operand 0, single buffered']
    #allocation3 [shape = 's32[1]{0}', space=sflag, size = 0x4, scoped, tag = 'scoped memory for tpu_custom_call.1']
    #allocation4 [shape = 's32[1]{0}', space=sflag, size = 0x4, scoped, tag = 'scoped memory for tpu_custom_call.1']
    #allocation5 [shape = 'u8[4096]{0}', space=vmem, size = 0x1000, scoped, tag = 'input window, operand 1, single buffered']
    #allocation6 [shape = 's32[1]{0}', space=sflag, size = 0x4, scoped, tag = 'scoped memory for tpu_custom_call.1']
    #allocation7 [shape = 'u8[32768]{0}', space=vmem, size = 0x8000, scoped, tag = 'input window, operand 3, single buffered']
    #allocation8 [shape = 'u8[1024]{0}', space=vmem, size = 0x400, scoped, tag = 'output window, operand 0, single buffered']
    %12 = vsyncpa [#allocation3], 0
    %13 = vsyncpa [#allocation6], 0
    %14 = vsyncpa [#allocation4], 0
    // Predicated region
    $region2: #{tpu_custom_call.1} parent=1 // pred_check
      _
    $region3: #{tpu_custom_call.1} parent=1 // pred_check_branch
      %16 = sbr.rel (0) target = $region5
    $region4: #{tpu_custom_call.1} parent=1 // pred_region
      %s18 = ssub.s32 128, 128
      %19 = vsyncadd [#allocation3], %s18
      %s20 = sshll.u32 [#allocation2], 4
      %s21 = int_to_ptr.vmem [resolvable:$true] %s20
      %26 = dma.hbm_to_vmem [thread:$0]  %s0, 128, %s21, [#allocation3], 64, 64, 4
    $region5: #{tpu_custom_call.1} parent=1 // pred_fallthru
      _
    // Predicated region
    $region6: #{tpu_custom_call.1} parent=1 // pred_check
      _
    $region7: #{tpu_custom_call.1} parent=1 // pred_check_branch
      %28 = sbr.rel (0) target = $region9
    $region8: #{tpu_custom_call.1} parent=1 // pred_region
      %s30 = ssub.s32 128, 128
      %31 = vsyncadd [#allocation6], %s30
      %s32 = sshll.u32 [#allocation5], 4
      %s33 = int_to_ptr.vmem [resolvable:$true] %s32
      %38 = dma.hbm_to_vmem [thread:$0]  %s1, 128, %s33, [#allocation6], 64, 64, 4
    $region9: #{tpu_custom_call.1} parent=1 // pred_fallthru
      _
    // Predicated region
    $region10: #{tpu_custom_call.1} parent=1 // pred_check
      _
    $region11: #{tpu_custom_call.1} parent=1 // pred_check_branch
      %40 = sbr.rel (0) target = $region13
    $region12: #{tpu_custom_call.1} parent=1 // pred_region
      _
    $region13: #{tpu_custom_call.1} parent=1 // pred_fallthru
      _
    // Predicated region
    $region14: #{tpu_custom_call.1} parent=1 // pred_check
      _
    $region15: #{tpu_custom_call.1} parent=1 // pred_check_branch
      %42 = sbr.rel (0) target = $region17
    $region16: #{tpu_custom_call.1} parent=1 // pred_region
      %s44 = ssub.s32 1024, 1024
      %45 = vsyncadd [#allocation6], %s44
      %s46 = sshll.u32 [#allocation7], 4
      %s47 = int_to_ptr.vmem [resolvable:$true] %s46
      %52 = dma.hbm_to_vmem [thread:$0]  %s3, 1024, %s47, [#allocation6], 128, 128, 8
    $region17: #{tpu_custom_call.1} parent=1 // pred_fallthru
      _
    // Predicated region
    $region18: #{tpu_custom_call.1} parent=1 // pred_check
      _
    $region19: #{tpu_custom_call.1} parent=1 // pred_check_branch
      %54 = sbr.rel (0) target = $region21
    $region20: #{tpu_custom_call.1} parent=1 // pred_region
      _
    $region21: #{tpu_custom_call.1} parent=1 // pred_fallthru
      _
    // Predicated region
    $region22: #{tpu_custom_call.1} parent=1 // pred_check
      _
    $region23: #{tpu_custom_call.1} parent=1 // pred_check_branch
      %56 = sbr.rel (0) target = $region25
    $region24: #{tpu_custom_call.1} parent=1 // pred_region
      _
    $region25: #{tpu_custom_call.1} parent=1 // pred_fallthru
      _
    // Predicated region
    $region26: #{tpu_custom_call.1} parent=1 // pred_check
      _
    $region27: #{tpu_custom_call.1} parent=1 // pred_check_branch
      %58 = sbr.rel (0) target = $region29
    $region28: #{tpu_custom_call.1} parent=1 // pred_region
      _
    $region29: #{tpu_custom_call.1} parent=1 // pred_fallthru
      _
    // Predicated region
    $region30: #{tpu_custom_call.1} parent=1 // pred_check
      _
    $region31: #{tpu_custom_call.1} parent=1 // pred_check_branch
      %60 = sbr.rel (0) target = $region33
    $region32: #{tpu_custom_call.1} parent=1 // pred_region
      %61 = dma.done [#allocation3], 128
    $region33: #{tpu_custom_call.1} parent=1 // pred_fallthru
      _
    // Predicated region
    $region34: #{tpu_custom_call.1} parent=1 // pred_check
      _
    $region35: #{tpu_custom_call.1} parent=1 // pred_check_branch
      %63 = sbr.rel (0) target = $region37
    $region36: #{tpu_custom_call.1} parent=1 // pred_region
      %64 = dma.done [#allocation6], 128
    $region37: #{tpu_custom_call.1} parent=1 // pred_fallthru
      _
    // Predicated region
    $region38: #{tpu_custom_call.1} parent=1 // pred_check
      _
    $region39: #{tpu_custom_call.1} parent=1 // pred_check_branch
      %66 = sbr.rel (0) target = $region41
    $region40: #{tpu_custom_call.1} parent=1 // pred_region
      %67 = dma.done [#allocation6], 1024
    $region41: #{tpu_custom_call.1} parent=1 // pred_fallthru
      _
    %v69 = vld [vmem:[#allocation7] sm:$0xff]
    %v70 = vld [vmem:[#allocation7 + $0x8] sm:$0xff]
    %v71 = vld [vmem:[#allocation7 + $0x10] sm:$0xff]
    %v72 = vld [vmem:[#allocation7 + $0x18] sm:$0xff]
    %v73 = vld [vmem:[#allocation7 + $0x20] sm:$0xff]
    %v74 = vld [vmem:[#allocation7 + $0x28] sm:$0xff]
    %v75 = vld [vmem:[#allocation7 + $0x30] sm:$0xff]
    %v76 = vld [vmem:[#allocation7 + $0x38] sm:$0xff]
    %v77 = vld [vmem:[%s4] sm:$0x1]
    %v78 = vld [vmem:[#allocation2] sm:$0xf]
    %v79 = vld [vmem:[#allocation2 + $0x4] sm:$0xf]
    %v80 = vld [vmem:[#allocation5] sm:$0xf]
    %v81 = vld [vmem:[#allocation5 + $0x4] sm:$0xf]
    %v82 = vld [vmem:[%s2] sm:$0x1]
    %v84 = vlaneseq
    %v85 = vshrl.u32 %v84, 7
    %v86 = vsub.s32 0, %v85
    %v87 = vrot.slane %v82, %v86
    %v91 = vunpack.c.l.b16 %v78
    %v92 = vunpack.c.l.b16 %v79
    %v93 = vpack.c.b16 %v92, %v91
    %v96 = vunpack.c.l.b16 %v80
    %v97 = vunpack.c.l.b16 %v81
    %v98 = vpack.c.b16 %v97, %v96
    %vm100 = vcmask 130048
    %v102 = vsel %vm100, %v93, 0
    %104 = vmatprep.subr.bf16.mxu0 0
    %105 = vmatpush1.bf16.msra.mxu0 %v98
    %106 = vmatprep.subr.bf16.mxu0 0
    %107 = vmatpush1.bf16.msra.mxu0 0
    %108 = vmatprep.subr.bf16.mxu0 0
    %109 = vmatpush1.bf16.msra.mxu0 0
    %110 = vmatprep.subr.bf16.mxu0 0
    %111 = vmatpush1.bf16.msra.mxu0 0
    %112 = vmatprep.subr.bf16.mxu0 0
    %113 = vmatpush1.bf16.msra.mxu0 0
    %114 = vmatprep.subr.bf16.mxu0 0
    %115 = vmatpush1.bf16.msra.mxu0 0
    %116 = vmatprep.subr.bf16.mxu0 0
    %117 = vmatpush1.bf16.msra.mxu0 0
    %118 = vmatprep.subr.bf16.mxu0 0
    %119 = vmatpush1.bf16.msra.mxu0 0
    %120 = vmatprep.subr.bf16.mxu0 0
    %121 = vmatpush1.bf16.msra.mxu0 0
    %122 = vmatprep.subr.bf16.mxu0 0
    %123 = vmatpush1.bf16.msra.mxu0 0
    %124 = vmatprep.subr.bf16.mxu0 0
    %125 = vmatpush1.bf16.msra.mxu0 0
    %126 = vmatprep.subr.bf16.mxu0 0
    %127 = vmatpush1.bf16.msra.mxu0 0
    %128 = vmatprep.subr.bf16.mxu0 0
    %129 = vmatpush1.bf16.msra.mxu0 0
    %130 = vmatprep.subr.bf16.mxu0 0
    %131 = vmatpush1.bf16.msra.mxu0 0
    %132 = vmatprep.subr.bf16.mxu0 0
    %133 = vmatpush1.bf16.msra.mxu0 0
    %134 = vmatprep.subr.bf16.mxu0 0
    %135 = vmatpush1.bf16.msra.mxu0 0
    %136 = vmatprep.mubr.bf16.mxu0 0
    %137 = vmatmul.mubr.bf16.gmra.mrb[0].mxu0 %v102
    %v138 = vpop.f32.mrb[0].mxu0
    %v139 = vadd.f32 %v87, %v138
    %v140 = vpop.f32.mrb[0].mxu0
    %v141 = vpop.f32.mrb[0].mxu0
    %v142 = vadd.f32 %v87, %v141
    %v143 = vpop.f32.mrb[0].mxu0
    %144 = vdwg.mxu0
    %v145 = vxor.u32 %v139, 2147483648
    %v146 = vmul.f32 %v145, 1.442695
    %v147 = vpow.pop %v146
    %v148 = vadd.f32 %v147, 1.0
    %v149 = vrcp.pop %v148
    %v150 = vmul.f32 1.0, %v149
    %v151 = vtanh.pop %v139
    %v152 = vmul.f32 %v150, 0.0
    %154 = vrot.lane.b32.xlu0 %v151, 64
    %v155 = vpop.permute.xlu0 %154
    %v157 = vmul.f32 %v150, %v155
    %159 = vrot.lane.b32.xlu0 %v157, 32
    %v160 = vpop.permute.xlu0 %159
    %v162 = vadd.f32 %v152, %v160
    %v163 = vtanh.pop %v162
    %165 = vrot.lane.b32.xlu0 %v163, 64
    %v166 = vpop.permute.xlu0 %165
    %v168 = vmul.f32 %v150, %v166
    %v169 = vpack.c.bf16 %v168, %v168
    %171 = vrot.lane.b32.xlu0 %v169, 32
    %v172 = vpop.permute.xlu0 %171
    %vm173 = vcmask 261120
    %v176 = vsel %vm173, %v172, 0
    %v185 = vunpack.c.l.b16 %v69
    %v186 = vunpack.c.h.b16 %v69
    %v187 = vunpack.c.l.b16 %v70
    %v188 = vunpack.c.h.b16 %v70
    %v189 = vunpack.c.l.b16 %v71
    %v190 = vunpack.c.h.b16 %v71
    %v191 = vunpack.c.l.b16 %v72
    %v192 = vunpack.c.h.b16 %v72
    %v193 = vunpack.c.l.b16 %v73
    %v194 = vunpack.c.h.b16 %v73
    %v195 = vunpack.c.l.b16 %v74
    %v196 = vunpack.c.h.b16 %v74
    %v197 = vunpack.c.l.b16 %v75
    %v198 = vunpack.c.h.b16 %v75
    %v199 = vunpack.c.l.b16 %v76
    %v200 = vunpack.c.h.b16 %v76
    %v201 = vpack.c.b16 %v187, %v185
    %v202 = vpack.c.b16 %v188, %v186
    %v203 = vpack.c.b16 %v191, %v189
    %v204 = vpack.c.b16 %v192, %v190
    %v205 = vpack.c.b16 %v195, %v193
    %v206 = vpack.c.b16 %v196, %v194
    %v207 = vpack.c.b16 %v199, %v197
    %v208 = vpack.c.b16 %v200, %v198
    %vm217 = vcmask 523264
    %v218 = vsel %vm217, %v176, 0
    %220 = vmatprep.subr.bf16.mxu0 %v202
    %221 = vmatpush1.bf16.msra.mxu0 %v201
    %222 = vmatprep.subr.bf16.mxu0 %v204
    %223 = vmatpush1.bf16.msra.mxu0 %v203
    %224 = vmatprep.subr.bf16.mxu0 %v206
    %225 = vmatpush1.bf16.msra.mxu0 %v205
    %226 = vmatprep.subr.bf16.mxu0 %v208
    %227 = vmatpush1.bf16.msra.mxu0 %v207
    %228 = vmatprep.subr.bf16.mxu0 0
    %229 = vmatpush1.bf16.msra.mxu0 0
    %230 = vmatprep.subr.bf16.mxu0 0
    %231 = vmatpush1.bf16.msra.mxu0 0
    %232 = vmatprep.subr.bf16.mxu0 0
    %233 = vmatpush1.bf16.msra.mxu0 0
    %234 = vmatprep.subr.bf16.mxu0 0
    %235 = vmatpush1.bf16.msra.mxu0 0
    %236 = vmatprep.subr.bf16.mxu0 0
    %237 = vmatpush1.bf16.msra.mxu0 0
    %238 = vmatprep.subr.bf16.mxu0 0
    %239 = vmatpush1.bf16.msra.mxu0 0
    %240 = vmatprep.subr.bf16.mxu0 0
    %241 = vmatpush1.bf16.msra.mxu0 0
    %242 = vmatprep.subr.bf16.mxu0 0
    %243 = vmatpush1.bf16.msra.mxu0 0
    %244 = vmatprep.subr.bf16.mxu0 0
    %245 = vmatpush1.bf16.msra.mxu0 0
    %246 = vmatprep.subr.bf16.mxu0 0
    %247 = vmatpush1.bf16.msra.mxu0 0
    %248 = vmatprep.subr.bf16.mxu0 0
    %249 = vmatpush1.bf16.msra.mxu0 0
    %250 = vmatprep.subr.bf16.mxu0 0
    %251 = vmatpush1.bf16.msra.mxu0 0
    %252 = vmatprep.mubr.bf16.mxu0 0
    %253 = vmatmul.mubr.bf16.gmra.mrb[0].mxu0 %v218
    %v254 = vpop.f32.mrb[0].mxu0
    %v255 = vadd.f32 0.0, %v254
    %v256 = vpop.f32.mrb[0].mxu0
    %v257 = vadd.f32 0.0, %v256
    %v258 = vpop.f32.mrb[0].mxu0
    %v259 = vpop.f32.mrb[0].mxu0
    %260 = vdwg.mxu0
    %v262 = vlaneseq
    %v263 = vshrl.u32 %v262, 7
    %v264 = vsub.s32 0, %v263
    %v265 = vrot.slane %v77, %v264
    %v267 = vadd.f32 %v257, %v265
    %v268 = vxor.u32 %v267, 2147483648
    %v269 = vmul.f32 %v268, 1.442695
    %v270 = vpow.pop %v269
    %v271 = vadd.f32 %v270, 1.0
    %v272 = vrcp.pop %v271
    %v273 = vmul.f32 1.0, %v272
    %v274 = vtanh.pop %v267
    %v275 = vmul.f32 %v273, 0.0
    %277 = vrot.lane.b32.xlu0 %v274, 64
    %v278 = vpop.permute.xlu0 %277
    %v280 = vmul.f32 %v273, %v278
    %282 = vrot.lane.b32.xlu0 %v280, 32
    %v283 = vpop.permute.xlu0 %282
    %v285 = vadd.f32 %v275, %v283
    %v286 = vtanh.pop %v285
    %288 = vrot.lane.b32.xlu0 %v286, 64
    %v289 = vpop.permute.xlu0 %288
    %v291 = vmul.f32 %v273, %v289
    %v292 = vpack.c.bf16 %v291, %v291
    %v294 = vrot.slane %v255, 6
    %v296 = vadd.f32 %v139, %v294
    %v297 = vxor.u32 %v296, 2147483648
    %v298 = vmul.f32 %v297, 1.442695
    %v299 = vpow.pop %v298
    %v300 = vadd.f32 %v299, 1.0
    %v301 = vrcp.pop %v300
    %v302 = vmul.f32 1.0, %v301
    %v303 = vtanh.pop %v296
    %v305 = vrot.slane %v162, 6
    %v307 = vmul.f32 %v302, %v305
    %309 = vrot.lane.b32.xlu0 %v303, 64
    %v310 = vpop.permute.xlu0 %309
    %v312 = vmul.f32 %v302, %v310
    %314 = vrot.lane.b32.xlu0 %v312, 32
    %v315 = vpop.permute.xlu0 %314
    %v317 = vadd.f32 %v307, %v315
    %v318 = vtanh.pop %v317
    %320 = vrot.lane.b32.xlu0 %v318, 64
    %v321 = vpop.permute.xlu0 %320
    %v323 = vmul.f32 %v302, %v321
    %v324 = vpack.c.bf16 %v323, %v323
    %326 = vrot.lane.b32.xlu0 %v324, 32
    %v327 = vpop.permute.xlu0 %326
    %v329 = vrot.slane %v292, 7
    %330 = vrot.lane.b32.xlu0 %v329, 64
    %v331 = vpop.permute.xlu0 %330
    %v334 = vsel %vm173, %v327, %v331
    %v336 = vrot.slane %v334, 1
    %v338 = vsel %vm217, %v336, 0
    %340 = vmatprep.subr.bf16.mxu0 %v202
    %341 = vmatpush1.bf16.msra.mxu0 %v201
    %342 = vmatprep.subr.bf16.mxu0 %v204
    %343 = vmatpush1.bf16.msra.mxu0 %v203
    %344 = vmatprep.subr.bf16.mxu0 %v206
    %345 = vmatpush1.bf16.msra.mxu0 %v205
    %346 = vmatprep.subr.bf16.mxu0 %v208
    %347 = vmatpush1.bf16.msra.mxu0 %v207
    %348 = vmatprep.subr.bf16.mxu0 0
    %349 = vmatpush1.bf16.msra.mxu0 0
    %350 = vmatprep.subr.bf16.mxu0 0
    %351 = vmatpush1.bf16.msra.mxu0 0
    %352 = vmatprep.subr.bf16.mxu0 0
    %353 = vmatpush1.bf16.msra.mxu0 0
    %354 = vmatprep.subr.bf16.mxu0 0
    %355 = vmatpush1.bf16.msra.mxu0 0
    %356 = vmatprep.subr.bf16.mxu0 0
    %357 = vmatpush1.bf16.msra.mxu0 0
    %358 = vmatprep.subr.bf16.mxu0 0
    %359 = vmatpush1.bf16.msra.mxu0 0
    %360 = vmatprep.subr.bf16.mxu0 0
    %361 = vmatpush1.bf16.msra.mxu0 0
    %362 = vmatprep.subr.bf16.mxu0 0
    %363 = vmatpush1.bf16.msra.mxu0 0
    %364 = vmatprep.subr.bf16.mxu0 0
    %365 = vmatpush1.bf16.msra.mxu0 0
    %366 = vmatprep.subr.bf16.mxu0 0
    %367 = vmatpush1.bf16.msra.mxu0 0
    %368 = vmatprep.subr.bf16.mxu0 0
    %369 = vmatpush1.bf16.msra.mxu0 0
    %370 = vmatprep.subr.bf16.mxu0 0
    %371 = vmatpush1.bf16.msra.mxu0 0
    %372 = vmatprep.mubr.bf16.mxu0 0
    %373 = vmatmul.mubr.bf16.gmra.mrb[0].mxu0 %v338
    %v374 = vpop.f32.mrb[0].mxu0
    %v375 = vadd.f32 0.0, %v374
    %v376 = vpop.f32.mrb[0].mxu0
    %v377 = vadd.f32 0.0, %v376
    %v378 = vpop.f32.mrb[0].mxu0
    %v379 = vpop.f32.mrb[0].mxu0
    %380 = vdwg.mxu0
    %v381 = vadd.f32 %v377, %v265
    %v382 = vxor.u32 %v381, 2147483648
    %v383 = vmul.f32 %v382, 1.442695
    %v384 = vpow.pop %v383
    %v385 = vadd.f32 %v384, 1.0
    %v386 = vrcp.pop %v385
    %v387 = vmul.f32 1.0, %v386
    %v388 = vtanh.pop %v381
    %v389 = vmul.f32 %v387, %v285
    %391 = vrot.lane.b32.xlu0 %v388, 64
    %v392 = vpop.permute.xlu0 %391
    %v394 = vmul.f32 %v387, %v392
    %396 = vrot.lane.b32.xlu0 %v394, 32
    %v397 = vpop.permute.xlu0 %396
    %v399 = vadd.f32 %v389, %v397
    %v400 = vtanh.pop %v399
    %402 = vrot.lane.b32.xlu0 %v400, 64
    %v403 = vpop.permute.xlu0 %402
    %v405 = vmul.f32 %v387, %v403
    %v406 = vpack.c.bf16 %v405, %v405
    %v408 = vrot.slane %v375, 4
    %v410 = vadd.f32 %v139, %v408
    %v411 = vxor.u32 %v410, 2147483648
    %v412 = vmul.f32 %v411, 1.442695
    %v413 = vpow.pop %v412
    %v414 = vadd.f32 %v413, 1.0
    %v415 = vrcp.pop %v414
    %v416 = vmul.f32 1.0, %v415
    %v417 = vtanh.pop %v410
    %v419 = vrot.slane %v317, 6
    %v421 = vmul.f32 %v416, %v419
    %423 = vrot.lane.b32.xlu0 %v417, 64
    %v424 = vpop.permute.xlu0 %423
    %v426 = vmul.f32 %v416, %v424
    %428 = vrot.lane.b32.xlu0 %v426, 32
    %v429 = vpop.permute.xlu0 %428
    %v431 = vadd.f32 %v421, %v429
    %v432 = vtanh.pop %v431
    %434 = vrot.lane.b32.xlu0 %v432, 64
    %v435 = vpop.permute.xlu0 %434
    %v437 = vmul.f32 %v416, %v435
    %v438 = vpack.c.bf16 %v437, %v437
    %440 = vrot.lane.b32.xlu0 %v438, 32
    %v441 = vpop.permute.xlu0 %440
    %v443 = vrot.slane %v406, 6
    %444 = vrot.lane.b32.xlu0 %v443, 64
    %v445 = vpop.permute.xlu0 %444
    %v448 = vsel %vm173, %v441, %v445
    %v450 = vrot.slane %v448, 2
    %v452 = vsel %vm217, %v450, 0
    %454 = vmatprep.subr.bf16.mxu0 %v202
    %455 = vmatpush1.bf16.msra.mxu0 %v201
    %456 = vmatprep.subr.bf16.mxu0 %v204
    %457 = vmatpush1.bf16.msra.mxu0 %v203
    %458 = vmatprep.subr.bf16.mxu0 %v206
    %459 = vmatpush1.bf16.msra.mxu0 %v205
    %460 = vmatprep.subr.bf16.mxu0 %v208
    %461 = vmatpush1.bf16.msra.mxu0 %v207
    %462 = vmatprep.subr.bf16.mxu0 0
    %463 = vmatpush1.bf16.msra.mxu0 0
    %464 = vmatprep.subr.bf16.mxu0 0
    %465 = vmatpush1.bf16.msra.mxu0 0
    %466 = vmatprep.subr.bf16.mxu0 0
    %467 = vmatpush1.bf16.msra.mxu0 0
    %468 = vmatprep.subr.bf16.mxu0 0
    %469 = vmatpush1.bf16.msra.mxu0 0
    %470 = vmatprep.subr.bf16.mxu0 0
    %471 = vmatpush1.bf16.msra.mxu0 0
    %472 = vmatprep.subr.bf16.mxu0 0
    %473 = vmatpush1.bf16.msra.mxu0 0
    %474 = vmatprep.subr.bf16.mxu0 0
    %475 = vmatpush1.bf16.msra.mxu0 0
    %476 = vmatprep.subr.bf16.mxu0 0
    %477 = vmatpush1.bf16.msra.mxu0 0
    %478 = vmatprep.subr.bf16.mxu0 0
    %479 = vmatpush1.bf16.msra.mxu0 0
    %480 = vmatprep.subr.bf16.mxu0 0
    %481 = vmatpush1.bf16.msra.mxu0 0
    %482 = vmatprep.subr.bf16.mxu0 0
    %483 = vmatpush1.bf16.msra.mxu0 0
    %484 = vmatprep.subr.bf16.mxu0 0
    %485 = vmatpush1.bf16.msra.mxu0 0
    %486 = vmatprep.mubr.bf16.mxu0 0
    %487 = vmatmul.mubr.bf16.gmra.mrb[0].mxu0 %v452
    %v488 = vpop.f32.mrb[0].mxu0
    %v489 = vadd.f32 0.0, %v488
    %v490 = vpop.f32.mrb[0].mxu0
    %v491 = vadd.f32 0.0, %v490
    %v492 = vpop.f32.mrb[0].mxu0
    %v493 = vpop.f32.mrb[0].mxu0
    %494 = vdwg.mxu0
    %v495 = vadd.f32 %v491, %v265
    %v496 = vxor.u32 %v495, 2147483648
    %v497 = vmul.f32 %v496, 1.442695
    %v498 = vpow.pop %v497
    %v499 = vadd.f32 %v498, 1.0
    %v500 = vrcp.pop %v499
    %v501 = vmul.f32 1.0, %v500
    %v502 = vtanh.pop %v495
    %v503 = vmul.f32 %v501, %v399
    %505 = vrot.lane.b32.xlu0 %v502, 64
    %v506 = vpop.permute.xlu0 %505
    %v508 = vmul.f32 %v501, %v506
    %510 = vrot.lane.b32.xlu0 %v508, 32
    %v511 = vpop.permute.xlu0 %510
    %v513 = vadd.f32 %v503, %v511
    %v514 = vtanh.pop %v513
    %516 = vrot.lane.b32.xlu0 %v514, 64
    %v517 = vpop.permute.xlu0 %516
    %v519 = vmul.f32 %v501, %v517
    %v520 = vpack.c.bf16 %v519, %v519
    %v522 = vrot.slane %v489, 2
    %v524 = vadd.f32 %v139, %v522
    %v525 = vxor.u32 %v524, 2147483648
    %v526 = vmul.f32 %v525, 1.442695
    %v527 = vpow.pop %v526
    %v528 = vadd.f32 %v527, 1.0
    %v529 = vrcp.pop %v528
    %v530 = vmul.f32 1.0, %v529
    %v531 = vtanh.pop %v524
    %v533 = vrot.slane %v431, 6
    %v535 = vmul.f32 %v530, %v533
    %537 = vrot.lane.b32.xlu0 %v531, 64
    %v538 = vpop.permute.xlu0 %537
    %v540 = vmul.f32 %v530, %v538
    %542 = vrot.lane.b32.xlu0 %v540, 32
    %v543 = vpop.permute.xlu0 %542
    %v545 = vadd.f32 %v535, %v543
    %v546 = vtanh.pop %v545
    %548 = vrot.lane.b32.xlu0 %v546, 64
    %v549 = vpop.permute.xlu0 %548
    %v551 = vmul.f32 %v530, %v549
    %v552 = vpack.c.bf16 %v551, %v551
    %554 = vrot.lane.b32.xlu0 %v552, 32
    %v555 = vpop.permute.xlu0 %554
    %v557 = vrot.slane %v520, 5
    %558 = vrot.lane.b32.xlu0 %v557, 64
    %v559 = vpop.permute.xlu0 %558
    %v562 = vsel %vm173, %v555, %v559
    %v564 = vrot.slane %v562, 3
    %v566 = vsel %vm217, %v564, 0
    %568 = vmatprep.subr.bf16.mxu0 %v202
    %569 = vmatpush1.bf16.msra.mxu0 %v201
    %570 = vmatprep.subr.bf16.mxu0 %v204
    %571 = vmatpush1.bf16.msra.mxu0 %v203
    %572 = vmatprep.subr.bf16.mxu0 %v206
    %573 = vmatpush1.bf16.msra.mxu0 %v205
    %574 = vmatprep.subr.bf16.mxu0 %v208
    %575 = vmatpush1.bf16.msra.mxu0 %v207
    %576 = vmatprep.subr.bf16.mxu0 0
    %577 = vmatpush1.bf16.msra.mxu0 0
    %578 = vmatprep.subr.bf16.mxu0 0
    %579 = vmatpush1.bf16.msra.mxu0 0
    %580 = vmatprep.subr.bf16.mxu0 0
    %581 = vmatpush1.bf16.msra.mxu0 0
    %582 = vmatprep.subr.bf16.mxu0 0
    %583 = vmatpush1.bf16.msra.mxu0 0
    %584 = vmatprep.subr.bf16.mxu0 0
    %585 = vmatpush1.bf16.msra.mxu0 0
    %586 = vmatprep.subr.bf16.mxu0 0
    %587 = vmatpush1.bf16.msra.mxu0 0
    %588 = vmatprep.subr.bf16.mxu0 0
    %589 = vmatpush1.bf16.msra.mxu0 0
    %590 = vmatprep.subr.bf16.mxu0 0
    %591 = vmatpush1.bf16.msra.mxu0 0
    %592 = vmatprep.subr.bf16.mxu0 0
    %593 = vmatpush1.bf16.msra.mxu0 0
    %594 = vmatprep.subr.bf16.mxu0 0
    %595 = vmatpush1.bf16.msra.mxu0 0
    %596 = vmatprep.subr.bf16.mxu0 0
    %597 = vmatpush1.bf16.msra.mxu0 0
    %598 = vmatprep.subr.bf16.mxu0 0
    %599 = vmatpush1.bf16.msra.mxu0 0
    %600 = vmatprep.mubr.bf16.mxu0 0
    %601 = vmatmul.mubr.bf16.gmra.mrb[0].mxu0 %v566
    %v602 = vpop.f32.mrb[0].mxu0
    %v603 = vadd.f32 0.0, %v602
    %v604 = vpop.f32.mrb[0].mxu0
    %v605 = vadd.f32 0.0, %v604
    %v606 = vpop.f32.mrb[0].mxu0
    %v607 = vpop.f32.mrb[0].mxu0
    %608 = vdwg.mxu0
    %v609 = vadd.f32 %v605, %v265
    %v610 = vxor.u32 %v609, 2147483648
    %v611 = vmul.f32 %v610, 1.442695
    %v612 = vpow.pop %v611
    %v613 = vadd.f32 %v612, 1.0
    %v614 = vrcp.pop %v613
    %v615 = vmul.f32 1.0, %v614
    %v616 = vtanh.pop %v609
    %v617 = vmul.f32 %v615, %v513
    %619 = vrot.lane.b32.xlu0 %v616, 64
    %v620 = vpop.permute.xlu0 %619
    %v622 = vmul.f32 %v615, %v620
    %624 = vrot.lane.b32.xlu0 %v622, 32
    %v625 = vpop.permute.xlu0 %624
    %v627 = vadd.f32 %v617, %v625
    %v628 = vtanh.pop %v627
    %630 = vrot.lane.b32.xlu0 %v628, 64
    %v631 = vpop.permute.xlu0 %630
    %v633 = vmul.f32 %v615, %v631
    %v634 = vpack.c.bf16 %v633, %v633
    %v635 = vadd.f32 %v142, %v603
    %v636 = vxor.u32 %v635, 2147483648
    %v637 = vmul.f32 %v636, 1.442695
    %v638 = vpow.pop %v637
    %v639 = vadd.f32 %v638, 1.0
    %v640 = vrcp.pop %v639
    %v641 = vmul.f32 1.0, %v640
    %v642 = vtanh.pop %v635
    %v644 = vrot.slane %v545, 6
    %v646 = vmul.f32 %v641, %v644
    %648 = vrot.lane.b32.xlu0 %v642, 64
    %v649 = vpop.permute.xlu0 %648
    %v651 = vmul.f32 %v641, %v649
    %653 = vrot.lane.b32.xlu0 %v651, 32
    %v654 = vpop.permute.xlu0 %653
    %v656 = vadd.f32 %v646, %v654
    %v657 = vtanh.pop %v656
    %659 = vrot.lane.b32.xlu0 %v657, 64
    %v660 = vpop.permute.xlu0 %659
    %v662 = vmul.f32 %v641, %v660
    %v663 = vpack.c.bf16 %v662, %v662
    %665 = vrot.lane.b32.xlu0 %v663, 32
    %v666 = vpop.permute.xlu0 %665
    %668 = vrot.lane.b32.xlu0 %v634, 64
    %v669 = vpop.permute.xlu0 %668
    %v672 = vsel %vm173, %v666, %v669
    %v673 = vsel %vm217, %v672, 0
    %675 = vmatprep.subr.bf16.mxu0 %v202
    %676 = vmatpush1.bf16.msra.mxu0 %v201
    %677 = vmatprep.subr.bf16.mxu0 %v204
    %678 = vmatpush1.bf16.msra.mxu0 %v203
    %679 = vmatprep.subr.bf16.mxu0 %v206
    %680 = vmatpush1.bf16.msra.mxu0 %v205
    %681 = vmatprep.subr.bf16.mxu0 %v208
    %682 = vmatpush1.bf16.msra.mxu0 %v207
    %683 = vmatprep.subr.bf16.mxu0 0
    %684 = vmatpush1.bf16.msra.mxu0 0
    %685 = vmatprep.subr.bf16.mxu0 0
    %686 = vmatpush1.bf16.msra.mxu0 0
    %687 = vmatprep.subr.bf16.mxu0 0
    %688 = vmatpush1.bf16.msra.mxu0 0
    %689 = vmatprep.subr.bf16.mxu0 0
    %690 = vmatpush1.bf16.msra.mxu0 0
    %691 = vmatprep.subr.bf16.mxu0 0
    %692 = vmatpush1.bf16.msra.mxu0 0
    %693 = vmatprep.subr.bf16.mxu0 0
    %694 = vmatpush1.bf16.msra.mxu0 0
    %695 = vmatprep.subr.bf16.mxu0 0
    %696 = vmatpush1.bf16.msra.mxu0 0
    %697 = vmatprep.subr.bf16.mxu0 0
    %698 = vmatpush1.bf16.msra.mxu0 0
    %699 = vmatprep.subr.bf16.mxu0 0
    %700 = vmatpush1.bf16.msra.mxu0 0
    %701 = vmatprep.subr.bf16.mxu0 0
    %702 = vmatpush1.bf16.msra.mxu0 0
    %703 = vmatprep.subr.bf16.mxu0 0
    %704 = vmatpush1.bf16.msra.mxu0 0
    %705 = vmatprep.subr.bf16.mxu0 0
    %706 = vmatpush1.bf16.msra.mxu0 0
    %707 = vmatprep.mubr.bf16.mxu0 0
    %708 = vmatmul.mubr.bf16.gmra.mrb[0].mxu0 %v673
    %v709 = vpop.f32.mrb[0].mxu0
    %v710 = vadd.f32 0.0, %v709
    %v711 = vpop.f32.mrb[0].mxu0
    %v712 = vadd.f32 0.0, %v711
    %v713 = vpop.f32.mrb[0].mxu0
    %v714 = vpop.f32.mrb[0].mxu0
    %715 = vdwg.mxu0
    %v716 = vadd.f32 %v712, %v265
    %v717 = vxor.u32 %v716, 2147483648
    %v718 = vmul.f32 %v717, 1.442695
    %v719 = vpow.pop %v718
    %v720 = vadd.f32 %v719, 1.0
    %v721 = vrcp.pop %v720
    %v722 = vmul.f32 1.0, %v721
    %v723 = vtanh.pop %v716
    %v724 = vmul.f32 %v722, %v627
    %726 = vrot.lane.b32.xlu0 %v723, 64
    %v727 = vpop.permute.xlu0 %726
    %v729 = vmul.f32 %v722, %v727
    %731 = vrot.lane.b32.xlu0 %v729, 32
    %v732 = vpop.permute.xlu0 %731
    %v734 = vadd.f32 %v724, %v732
    %v735 = vtanh.pop %v734
    %737 = vrot.lane.b32.xlu0 %v735, 64
    %v738 = vpop.permute.xlu0 %737
    %v740 = vmul.f32 %v722, %v738
    %v741 = vpack.c.bf16 %v740, %v740
    %v743 = vrot.slane %v710, 6
    %v745 = vadd.f32 %v142, %v743
    %v746 = vxor.u32 %v745, 2147483648
    %v747 = vmul.f32 %v746, 1.442695
    %v748 = vpow.pop %v747
    %v749 = vadd.f32 %v748, 1.0
    %v750 = vrcp.pop %v749
    %v751 = vmul.f32 1.0, %v750
    %v752 = vtanh.pop %v745
    %v754 = vrot.slane %v656, 6
    %v756 = vmul.f32 %v751, %v754
    %758 = vrot.lane.b32.xlu0 %v752, 64
    %v759 = vpop.permute.xlu0 %758
    %v761 = vmul.f32 %v751, %v759
    %763 = vrot.lane.b32.xlu0 %v761, 32
    %v764 = vpop.permute.xlu0 %763
    %v766 = vadd.f32 %v756, %v764
    %v767 = vtanh.pop %v766
    %769 = vrot.lane.b32.xlu0 %v767, 64
    %v770 = vpop.permute.xlu0 %769
    %v772 = vmul.f32 %v751, %v770
    %v773 = vpack.c.bf16 %v772, %v772
    %775 = vrot.lane.b32.xlu0 %v773, 32
    %v776 = vpop.permute.xlu0 %775
    %v778 = vrot.slane %v741, 7
    %779 = vrot.lane.b32.xlu0 %v778, 64
    %v780 = vpop.permute.xlu0 %779
    %v783 = vsel %vm173, %v776, %v780
    %v785 = vrot.slane %v783, 1
    %v787 = vsel %vm217, %v785, 0
    %789 = vmatprep.subr.bf16.mxu0 %v202
    %790 = vmatpush1.bf16.msra.mxu0 %v201
    %791 = vmatprep.subr.bf16.mxu0 %v204
    %792 = vmatpush1.bf16.msra.mxu0 %v203
    %793 = vmatprep.subr.bf16.mxu0 %v206
    %794 = vmatpush1.bf16.msra.mxu0 %v205
    %795 = vmatprep.subr.bf16.mxu0 %v208
    %796 = vmatpush1.bf16.msra.mxu0 %v207
    %797 = vmatprep.subr.bf16.mxu0 0
    %798 = vmatpush1.bf16.msra.mxu0 0
    %799 = vmatprep.subr.bf16.mxu0 0
    %800 = vmatpush1.bf16.msra.mxu0 0
    %801 = vmatprep.subr.bf16.mxu0 0
    %802 = vmatpush1.bf16.msra.mxu0 0
    %803 = vmatprep.subr.bf16.mxu0 0
    %804 = vmatpush1.bf16.msra.mxu0 0
    %805 = vmatprep.subr.bf16.mxu0 0
    %806 = vmatpush1.bf16.msra.mxu0 0
    %807 = vmatprep.subr.bf16.mxu0 0
    %808 = vmatpush1.bf16.msra.mxu0 0
    %809 = vmatprep.subr.bf16.mxu0 0
    %810 = vmatpush1.bf16.msra.mxu0 0
    %811 = vmatprep.subr.bf16.mxu0 0
    %812 = vmatpush1.bf16.msra.mxu0 0
    %813 = vmatprep.subr.bf16.mxu0 0
    %814 = vmatpush1.bf16.msra.mxu0 0
    %815 = vmatprep.subr.bf16.mxu0 0
    %816 = vmatpush1.bf16.msra.mxu0 0
    %817 = vmatprep.subr.bf16.mxu0 0
    %818 = vmatpush1.bf16.msra.mxu0 0
    %819 = vmatprep.subr.bf16.mxu0 0
    %820 = vmatpush1.bf16.msra.mxu0 0
    %821 = vmatprep.mubr.bf16.mxu0 0
    %822 = vmatmul.mubr.bf16.gmra.mrb[0].mxu0 %v787
    %v823 = vpop.f32.mrb[0].mxu0
    %v824 = vadd.f32 0.0, %v823
    %v825 = vpop.f32.mrb[0].mxu0
    %v826 = vadd.f32 0.0, %v825
    %v827 = vpop.f32.mrb[0].mxu0
    %v828 = vpop.f32.mrb[0].mxu0
    %829 = vdwg.mxu0
    %v830 = vadd.f32 %v826, %v265
    %v831 = vxor.u32 %v830, 2147483648
    %v832 = vmul.f32 %v831, 1.442695
    %v833 = vpow.pop %v832
    %v834 = vadd.f32 %v833, 1.0
    %v835 = vrcp.pop %v834
    %v836 = vmul.f32 1.0, %v835
    %v837 = vtanh.pop %v830
    %v838 = vmul.f32 %v836, %v734
    %840 = vrot.lane.b32.xlu0 %v837, 64
    %v841 = vpop.permute.xlu0 %840
    %v843 = vmul.f32 %v836, %v841
    %845 = vrot.lane.b32.xlu0 %v843, 32
    %v846 = vpop.permute.xlu0 %845
    %v848 = vadd.f32 %v838, %v846
    %v849 = vtanh.pop %v848
    %851 = vrot.lane.b32.xlu0 %v849, 64
    %v852 = vpop.permute.xlu0 %851
    %v854 = vmul.f32 %v836, %v852
    %v855 = vpack.c.bf16 %v854, %v854
    %v857 = vrot.slane %v824, 4
    %v859 = vadd.f32 %v142, %v857
    %v860 = vxor.u32 %v859, 2147483648
    %v861 = vmul.f32 %v860, 1.442695
    %v862 = vpow.pop %v861
    %v863 = vadd.f32 %v862, 1.0
    %v864 = vrcp.pop %v863
    %v865 = vmul.f32 1.0, %v864
    %v866 = vtanh.pop %v859
    %v868 = vrot.slane %v766, 6
    %v870 = vmul.f32 %v865, %v868
    %872 = vrot.lane.b32.xlu0 %v866, 64
    %v873 = vpop.permute.xlu0 %872
    %v875 = vmul.f32 %v865, %v873
    %877 = vrot.lane.b32.xlu0 %v875, 32
    %v878 = vpop.permute.xlu0 %877
    %v880 = vadd.f32 %v870, %v878
    %v881 = vtanh.pop %v880
    %883 = vrot.lane.b32.xlu0 %v881, 64
    %v884 = vpop.permute.xlu0 %883
    %v886 = vmul.f32 %v865, %v884
    %v887 = vpack.c.bf16 %v886, %v886
    %889 = vrot.lane.b32.xlu0 %v887, 32
    %v890 = vpop.permute.xlu0 %889
    %v892 = vrot.slane %v855, 6
    %893 = vrot.lane.b32.xlu0 %v892, 64
    %v894 = vpop.permute.xlu0 %893
    %v897 = vsel %vm173, %v890, %v894
    %v899 = vrot.slane %v897, 2
    %v901 = vsel %vm217, %v899, 0
    %903 = vmatprep.subr.bf16.mxu0 %v202
    %904 = vmatpush1.bf16.msra.mxu0 %v201
    %905 = vmatprep.subr.bf16.mxu0 %v204
    %906 = vmatpush1.bf16.msra.mxu0 %v203
    %907 = vmatprep.subr.bf16.mxu0 %v206
    %908 = vmatpush1.bf16.msra.mxu0 %v205
    %909 = vmatprep.subr.bf16.mxu0 %v208
    %910 = vmatpush1.bf16.msra.mxu0 %v207
    %911 = vmatprep.subr.bf16.mxu0 0
    %912 = vmatpush1.bf16.msra.mxu0 0
    %913 = vmatprep.subr.bf16.mxu0 0
    %914 = vmatpush1.bf16.msra.mxu0 0
    %915 = vmatprep.subr.bf16.mxu0 0
    %916 = vmatpush1.bf16.msra.mxu0 0
    %917 = vmatprep.subr.bf16.mxu0 0
    %918 = vmatpush1.bf16.msra.mxu0 0
    %919 = vmatprep.subr.bf16.mxu0 0
    %920 = vmatpush1.bf16.msra.mxu0 0
    %921 = vmatprep.subr.bf16.mxu0 0
    %922 = vmatpush1.bf16.msra.mxu0 0
    %923 = vmatprep.subr.bf16.mxu0 0
    %924 = vmatpush1.bf16.msra.mxu0 0
    %925 = vmatprep.subr.bf16.mxu0 0
    %926 = vmatpush1.bf16.msra.mxu0 0
    %927 = vmatprep.subr.bf16.mxu0 0
    %928 = vmatpush1.bf16.msra.mxu0 0
    %929 = vmatprep.subr.bf16.mxu0 0
    %930 = vmatpush1.bf16.msra.mxu0 0
    %931 = vmatprep.subr.bf16.mxu0 0
    %932 = vmatpush1.bf16.msra.mxu0 0
    %933 = vmatprep.subr.bf16.mxu0 0
    %934 = vmatpush1.bf16.msra.mxu0 0
    %935 = vmatprep.mubr.bf16.mxu0 0
    %936 = vmatmul.mubr.bf16.gmra.mrb[0].mxu0 %v901
    %v937 = vpop.f32.mrb[0].mxu0
    %v938 = vadd.f32 0.0, %v937
    %v939 = vpop.f32.mrb[0].mxu0
    %v940 = vadd.f32 0.0, %v939
    %v941 = vpop.f32.mrb[0].mxu0
    %v942 = vpop.f32.mrb[0].mxu0
    %943 = vdwg.mxu0
    %v944 = vadd.f32 %v940, %v265
    %v945 = vxor.u32 %v944, 2147483648
    %v946 = vmul.f32 %v945, 1.442695
    %v947 = vpow.pop %v946
    %v948 = vadd.f32 %v947, 1.0
    %v949 = vrcp.pop %v948
    %v950 = vmul.f32 1.0, %v949
    %v951 = vtanh.pop %v944
    %v952 = vmul.f32 %v950, %v848
    %954 = vrot.lane.b32.xlu0 %v951, 64
    %v955 = vpop.permute.xlu0 %954
    %v957 = vmul.f32 %v950, %v955
    %959 = vrot.lane.b32.xlu0 %v957, 32
    %v960 = vpop.permute.xlu0 %959
    %v962 = vadd.f32 %v952, %v960
    %v963 = vtanh.pop %v962
    %965 = vrot.lane.b32.xlu0 %v963, 64
    %v966 = vpop.permute.xlu0 %965
    %v968 = vmul.f32 %v950, %v966
    %v969 = vpack.c.bf16 %v968, %v968
    %v971 = vrot.slane %v938, 2
    %v973 = vadd.f32 %v142, %v971
    %v974 = vxor.u32 %v973, 2147483648
    %v975 = vmul.f32 %v974, 1.442695
    %v976 = vpow.pop %v975
    %v977 = vadd.f32 %v976, 1.0
    %v978 = vrcp.pop %v977
    %v979 = vmul.f32 1.0, %v978
    %v980 = vtanh.pop %v973
    %v982 = vrot.slane %v880, 6
    %v984 = vmul.f32 %v979, %v982
    %986 = vrot.lane.b32.xlu0 %v980, 64
    %v987 = vpop.permute.xlu0 %986
    %v989 = vmul.f32 %v979, %v987
    %991 = vrot.lane.b32.xlu0 %v989, 32
    %v992 = vpop.permute.xlu0 %991
    %v994 = vadd.f32 %v984, %v992
    %v995 = vtanh.pop %v994
    %997 = vrot.lane.b32.xlu0 %v995, 64
    %v998 = vpop.permute.xlu0 %997
    %v1000 = vmul.f32 %v979, %v998
    %v1001 = vpack.c.bf16 %v1000, %v1000
    %1003 = vrot.lane.b32.xlu0 %v1001, 32
    %v1004 = vpop.permute.xlu0 %1003
    %v1006 = vrot.slane %v969, 5
    %1007 = vrot.lane.b32.xlu0 %v1006, 64
    %v1008 = vpop.permute.xlu0 %1007
    %v1011 = vsel %vm173, %v1004, %v1008
    %v1013 = vrot.slane %v1011, 3
    %v1015 = vsel %vm217, %v1013, 0
    %1017 = vmatprep.subr.bf16.mxu0 %v202
    %1018 = vmatpush1.bf16.msra.mxu0 %v201
    %1019 = vmatprep.subr.bf16.mxu0 %v204
    %1020 = vmatpush1.bf16.msra.mxu0 %v203
    %1021 = vmatprep.subr.bf16.mxu0 %v206
    %1022 = vmatpush1.bf16.msra.mxu0 %v205
    %1023 = vmatprep.subr.bf16.mxu0 %v208
    %1024 = vmatpush1.bf16.msra.mxu0 %v207
    %1025 = vmatprep.subr.bf16.mxu0 0
    %1026 = vmatpush1.bf16.msra.mxu0 0
    %1027 = vmatprep.subr.bf16.mxu0 0
    %1028 = vmatpush1.bf16.msra.mxu0 0
    %1029 = vmatprep.subr.bf16.mxu0 0
    %1030 = vmatpush1.bf16.msra.mxu0 0
    %1031 = vmatprep.subr.bf16.mxu0 0
    %1032 = vmatpush1.bf16.msra.mxu0 0
    %1033 = vmatprep.subr.bf16.mxu0 0
    %1034 = vmatpush1.bf16.msra.mxu0 0
    %1035 = vmatprep.subr.bf16.mxu0 0
    %1036 = vmatpush1.bf16.msra.mxu0 0
    %1037 = vmatprep.subr.bf16.mxu0 0
    %1038 = vmatpush1.bf16.msra.mxu0 0
    %1039 = vmatprep.subr.bf16.mxu0 0
    %1040 = vmatpush1.bf16.msra.mxu0 0
    %1041 = vmatprep.subr.bf16.mxu0 0
    %1042 = vmatpush1.bf16.msra.mxu0 0
    %1043 = vmatprep.subr.bf16.mxu0 0
    %1044 = vmatpush1.bf16.msra.mxu0 0
    %1045 = vmatprep.subr.bf16.mxu0 0
    %1046 = vmatpush1.bf16.msra.mxu0 0
    %1047 = vmatprep.subr.bf16.mxu0 0
    %1048 = vmatpush1.bf16.msra.mxu0 0
    %1049 = vmatprep.mubr.bf16.mxu0 0
    %1050 = vmatmul.mubr.bf16.gmra.mrb[0].mxu0 %v1015
    %v1051 = vpop.f32.mrb[0].mxu0
    %v1052 = vpop.f32.mrb[0].mxu0
    %v1053 = vadd.f32 0.0, %v1052
    %v1054 = vpop.f32.mrb[0].mxu0
    %v1055 = vpop.f32.mrb[0].mxu0
    %1056 = vdwg.mxu0
    %v1057 = vadd.f32 %v1053, %v265
    %v1058 = vxor.u32 %v1057, 2147483648
    %v1059 = vmul.f32 %v1058, 1.442695
    %v1060 = vpow.pop %v1059
    %v1061 = vadd.f32 %v1060, 1.0
    %v1062 = vrcp.pop %v1061
    %v1063 = vmul.f32 1.0, %v1062
    %v1064 = vtanh.pop %v1057
    %v1065 = vmul.f32 %v1063, %v962
    %1067 = vrot.lane.b32.xlu0 %v1064, 64
    %v1068 = vpop.permute.xlu0 %1067
    %v1070 = vmul.f32 %v1063, %v1068
    %1072 = vrot.lane.b32.xlu0 %v1070, 32
    %v1073 = vpop.permute.xlu0 %1072
    %v1075 = vadd.f32 %v1065, %v1073
    %v1076 = vtanh.pop %v1075
    %1078 = vrot.lane.b32.xlu0 %v1076, 64
    %v1079 = vpop.permute.xlu0 %1078
    %v1081 = vmul.f32 %v1063, %v1079
    %v1082 = vpack.c.bf16 %v1081, %v1081
    %v1083 = vld [vmem:[%s5] sm:$0xf]
    %v1084 = vld [vmem:[%s5 + $0x4] sm:$0xf]
    %v1085 = vld [vmem:[%s5 + $0x8] sm:$0xf]
    %v1086 = vld [vmem:[%s5 + $0xc] sm:$0xf]
    %v1087 = vld [vmem:[%s6] sm:$0x1]
    %v1089 = vlaneseq
    %v1090 = vshrl.u32 %v1089, 7
    %v1091 = vsub.s32 0, %v1090
    %v1092 = vrot.slane %v1087, %v1091
    %1095 = vrot.lane.b32.xlu0 %v1082, 32
    %v1096 = vpop.permute.xlu0 %1095
    %v1101 = vunpack.c.l.b16 %v1083
    %v1102 = vunpack.c.l.b16 %v1084
    %v1103 = vunpack.c.l.b16 %v1085
    %v1104 = vunpack.c.l.b16 %v1086
    %v1105 = vpack.c.b16 %v1102, %v1101
    %v1106 = vpack.c.b16 %v1104, %v1103
    %v1110 = vsel %vm173, %v1096, 0
    %1112 = vmatprep.subr.bf16.mxu0 0
    %1113 = vmatpush1.bf16.msra.mxu0 %v1105
    %1114 = vmatprep.subr.bf16.mxu0 0
    %1115 = vmatpush1.bf16.msra.mxu0 %v1106
    %1116 = vmatprep.subr.bf16.mxu0 0
    %1117 = vmatpush1.bf16.msra.mxu0 0
    %1118 = vmatprep.subr.bf16.mxu0 0
    %1119 = vmatpush1.bf16.msra.mxu0 0
    %1120 = vmatprep.subr.bf16.mxu0 0
    %1121 = vmatpush1.bf16.msra.mxu0 0
    %1122 = vmatprep.subr.bf16.mxu0 0
    %1123 = vmatpush1.bf16.msra.mxu0 0
    %1124 = vmatprep.subr.bf16.mxu0 0
    %1125 = vmatpush1.bf16.msra.mxu0 0
    %1126 = vmatprep.subr.bf16.mxu0 0
    %1127 = vmatpush1.bf16.msra.mxu0 0
    %1128 = vmatprep.subr.bf16.mxu0 0
    %1129 = vmatpush1.bf16.msra.mxu0 0
    %1130 = vmatprep.subr.bf16.mxu0 0
    %1131 = vmatpush1.bf16.msra.mxu0 0
    %1132 = vmatprep.subr.bf16.mxu0 0
    %1133 = vmatpush1.bf16.msra.mxu0 0
    %1134 = vmatprep.subr.bf16.mxu0 0
    %1135 = vmatpush1.bf16.msra.mxu0 0
    %1136 = vmatprep.subr.bf16.mxu0 0
    %1137 = vmatpush1.bf16.msra.mxu0 0
    %1138 = vmatprep.subr.bf16.mxu0 0
    %1139 = vmatpush1.bf16.msra.mxu0 0
    %1140 = vmatprep.subr.bf16.mxu0 0
    %1141 = vmatpush1.bf16.msra.mxu0 0
    %1142 = vmatprep.subr.bf16.mxu0 0
    %1143 = vmatpush1.bf16.msra.mxu0 0
    %1144 = vmatprep.mubr.bf16.mxu0 0
    %1145 = vmatmul.mubr.bf16.gmra.mrb[0].mxu0 %v1110
    %v1146 = vpop.f32.mrb[0].mxu0
    %v1147 = vadd.f32 %v1092, %v1146
    %v1148 = vpop.f32.mrb[0].mxu0
    %v1149 = vpop.f32.mrb[0].mxu0
    %v1150 = vpop.f32.mrb[0].mxu0
    %1151 = vdwg.mxu0
    %1152 = vst [vmem:[#allocation8] sm:$0x3] %v1147
    // Predicated region
    $region42: #{tpu_custom_call.1} parent=1 // pred_check
      _
    $region43: #{tpu_custom_call.1} parent=1 // pred_check_branch
      %1154 = sbr.rel (0) target = $region45
    $region44: #{tpu_custom_call.1} parent=1 // pred_region
      %s1156 = ssub.s32 32, 32
      %1157 = vsyncadd [#allocation4], %s1156
      %s1159 = sshll.u32 [#allocation8], 4
      %s1160 = int_to_ptr.vmem [resolvable:$true] %s1159
      %1162 = dma.vmem_to_hbm [thread:$0]  %s1160, 32, %s7, [#allocation4]
    $region45: #{tpu_custom_call.1} parent=1 // pred_fallthru
      _
    // Predicated region
    $region46: #{tpu_custom_call.1} parent=1 // pred_check
      _
    $region47: #{tpu_custom_call.1} parent=1 // pred_check_branch
      %1164 = sbr.rel (0) target = $region49
    $region48: #{tpu_custom_call.1} parent=1 // pred_region
      %1165 = dma.done [#allocation4], 32
    $region49: #{tpu_custom_call.1} parent=1 // pred_fallthru
      _
    %1166 = vsyncpa [#allocation3], 1
    %1167 = vsyncpa [#allocation6], 1
    %1168 = vsyncpa [#allocation4], 1

</llo_original>
